<compile_context>
chip_gen: v6e
topology: v6e:2x2x1
jax: 0.10.0
libtpu: 0.0.40
codegen_flags: <defaults>
</compile_context>

<pallas_src>
import functools

import jax
import jax.numpy as jnp
from jax.experimental import pallas as pl
from jax.experimental.pallas import tpu as pltpu

EPS = 1e-5  # nn.LayerNorm default


def _layernorm(x, g, b):
    mu = jnp.mean(x, axis=-1, keepdims=True)
    var = jnp.mean((x - mu) ** 2, axis=-1, keepdims=True)
    return (x - mu) * jax.lax.rsqrt(var + EPS) * g + b


# --------------------------------------------------------------------------
# Fused kernel: one grid step = ALL transformer layers on one row-block of x.
# Weights live in VMEM for the whole call (constant-index full-array blocks).
# --------------------------------------------------------------------------
def transformer_kernel(x_ref, y_ref, vec_ref,
                       wq_ref, wkv_ref, wo_ref, w1_ref, w2_ref,
                       o_ref, *, heads, dim_head):
    depth = wq_ref.shape[0]
    D = x_ref.shape[-1]
    mlp_dim = w1_ref.shape[-1]
    inner = heads * dim_head

    x = x_ref[...].astype(jnp.float32)
    y = y_ref[...].astype(jnp.float32)

    for d in range(depth):                       # depth is small & static
        vec = vec_ref[d]                         # (8, vmax) packed f32 vectors
        ag, ab = vec[0:1, :D], vec[1:2, :D]      # attn LayerNorm gamma / beta
        bo = vec[2:3, :D]                        # output-projection bias
        fg, fb = vec[3:4, :D], vec[4:5, :D]      # ff LayerNorm gamma / beta
        b1 = vec[5:6, :mlp_dim]                  # ff hidden bias
        b2 = vec[6:7, :D]                        # ff output bias

        # ------------- PreNorm + cross-attention + residual ----------------
        xn = _layernorm(x, ag, ab)               # same LN params for x and y
        yn = _layernorm(y, ag, ab)
        # 1/sqrt(dim_head) is pre-folded into the bf16 wq in the wrapper.
        q = jnp.dot(xn.astype(jnp.bfloat16), wq_ref[d],
                    preferred_element_type=jnp.float32)
        kv = jnp.dot(yn.astype(jnp.bfloat16), wkv_ref[d],       # packed [K|V]
                     preferred_element_type=jnp.float32)

        head_outs = []
        for h in range(heads):                   # static unroll; heads small
            lo = h * dim_head
            qh = q[:, lo:lo + dim_head].astype(jnp.bfloat16)
            kh = kv[:, lo:lo + dim_head].astype(jnp.bfloat16)
            vh = kv[:, inner + lo:inner + lo + dim_head].astype(jnp.bfloat16)
            # q · kᵀ without a materialized transpose: contract last dims.
            dots = jax.lax.dot_general(qh, kh, (((1,), (1,)), ((), ())),
                                       preferred_element_type=jnp.float32)
            m = jnp.max(dots, axis=-1, keepdims=True)
            e = jnp.exp(dots - m)
            p = e * pl.reciprocal(jnp.sum(e, axis=-1, keepdims=True),
                                  approx=True)
            head_outs.append(jnp.dot(p.astype(jnp.bfloat16), vh,
                                     preferred_element_type=jnp.float32))
        # ONE wide output-projection matmul instead of `heads` tiny ones.
        attn = jnp.concatenate(head_outs, axis=-1)               # (rows, inner)
        x = jnp.dot(attn.astype(jnp.bfloat16), wo_ref[d],
                    preferred_element_type=jnp.float32) + bo + x

        # ------------- PreNorm + FeedForward + residual ---------------------
        xn2 = _layernorm(x, fg, fb)
        h1 = jnp.dot(xn2.astype(jnp.bfloat16), w1_ref[d],
                     preferred_element_type=jnp.float32) + b1
        h1 = jax.nn.gelu(h1, approximate=True)   # tanh GELU -> EUP slot
        x = jnp.dot(h1.astype(jnp.bfloat16), w2_ref[d],
                    preferred_element_type=jnp.float32) + b2 + x

    o_ref[...] = x.astype(o_ref.dtype)


def transformer_forward(x, y, params, *, heads, dim_head, block_rows=None):
    N, D = x.shape
    M, _ = y.shape
    depth = params["wq"].shape[0]
    inner = heads * dim_head
    mlp_dim = params["w1"].shape[-1]
    vmax = max(D, mlp_dim)

    if block_rows is None:
        # >=2 row blocks once N >= 16 so both v7x TensorCores get work;
        # tiny N runs as a single block (must stay a multiple of 8 otherwise).
        block_rows = N if N < 16 else max(8, N // 2)
    assert N % block_rows == 0
    assert block_rows == N or block_rows % 8 == 0
    grid = (N // block_rows,)

    # bf16 weights for the MXU; fold the 1/sqrt(d) scale into wq once.
    scale = dim_head ** -0.5
    wq = (params["wq"] * scale).astype(jnp.bfloat16)
    wkv = params["wkv"].astype(jnp.bfloat16)
    wo = params["wo"].astype(jnp.bfloat16)
    w1 = params["w1"].astype(jnp.bfloat16)
    w2 = params["w2"].astype(jnp.bfloat16)

    # Pack the 7 per-layer (1, D)/(1, mlp_dim) vectors into one f32 tensor
    # (depth, 8, vmax): rows = [attn_g, attn_b, bo, ff_g, ff_b, b1, b2, pad].
    def padv(v):
        return jnp.pad(v, ((0, 0), (0, 0), (0, vmax - v.shape[-1])))
    vec = jnp.concatenate(
        [padv(params[k]) for k in
         ("attn_g", "attn_b", "bo", "ff_g", "ff_b", "b1", "b2")], axis=1)
    vec = jnp.pad(vec, ((0, 0), (0, 8 - vec.shape[1]), (0, 0)))

    def full(shape):
        # Whole array as one block, fetched once (constant index map).
        return pl.BlockSpec(shape, lambda r, _s=shape: (0,) * len(_s))

    in_specs = [
        pl.BlockSpec((block_rows, D), lambda r: (r, 0)),   # x (row-blocked)
        full((M, D)),                                      # y
        full((depth, 8, vmax)),                            # packed LN/bias vecs
        full((depth, D, inner)),                            # wq (scaled, bf16)
        full((depth, D, 2 * inner)),                        # wkv  [Wk | Wv]
        full((depth, inner, D)),                            # wo
        full((depth, D, mlp_dim)),                          # w1
        full((depth, mlp_dim, D)),                          # w2
    ]
    out_spec = pl.BlockSpec((block_rows, D), lambda r: (r, 0))

    return pl.pallas_call(
        functools.partial(transformer_kernel, heads=heads, dim_head=dim_head),
        out_shape=jax.ShapeDtypeStruct((N, D), x.dtype),
        grid=grid,
        in_specs=in_specs,
        out_specs=out_spec,
        compiler_params=pltpu.CompilerParams(
            dimension_semantics=("parallel",),
            # Explicit VMEM budget; safe on v5e/v6e (128 MiB) and v7x (64 MiB).
            vmem_limit_bytes=32 * 1024 * 1024),
    )(x, y, vec, wq, wkv, wo, w1, w2)


# --------------------------------------------------------------------------
# Parameter init (per-layer tensors stacked on a leading depth axis, f32).
# --------------------------------------------------------------------------
def init_params(key, *, dim, depth, heads, dim_head, mlp_dim):
    inner = heads * dim_head
    keys = jax.random.split(key, 5)

    def w(k, shape):
        return 0.02 * jax.random.normal(k, shape, jnp.float32)

    return {
        "attn_g": jnp.ones((depth, 1, dim), jnp.float32),
        "attn_b": jnp.zeros((depth, 1, dim), jnp.float32),
        "wq": w(keys[0], (depth, dim, inner)),
        "wkv": w(keys[1], (depth, dim, 2 * inner)),   # packed [Wk | Wv]
        "wo": w(keys[2], (depth, inner, dim)),
        "bo": jnp.zeros((depth, 1, dim), jnp.float32),
        "ff_g": jnp.ones((depth, 1, dim), jnp.float32),
        "ff_b": jnp.zeros((depth, 1, dim), jnp.float32),
        "w1": w(keys[3], (depth, dim, mlp_dim)),
        "b1": jnp.zeros((depth, 1, mlp_dim), jnp.float32),
        "w2": w(keys[4], (depth, mlp_dim, dim)),
        "b2": jnp.zeros((depth, 1, dim), jnp.float32),
    }


# --------------------------------------------------------------------------
# Pure-JAX f32 reference (mirrors the PyTorch module) for a correctness check.
# --------------------------------------------------------------------------
def reference_forward(x, y, params, *, heads, dim_head):
    depth = params["wq"].shape[0]
    inner = heads * dim_head
    scale = dim_head ** -0.5
    for d in range(depth):
        g, b = params["attn_g"][d], params["attn_b"][d]
        xn, yn = _layernorm(x, g, b), _layernorm(y, g, b)   # same LN for x & y
        q = xn @ params["wq"][d]
        kv = yn @ params["wkv"][d]
        k, v = kv[:, :inner], kv[:, inner:]
        outs = []
        for h in range(heads):
            sl = slice(h * dim_head, (h + 1) * dim_head)
            dots = (q[:, sl] * scale) @ k[:, sl].T
            outs.append(jax.nn.softmax(dots, axis=-1) @ v[:, sl])
        x = jnp.concatenate(outs, -1) @ params["wo"][d] + params["bo"][d] + x
        xn2 = _layernorm(x, params["ff_g"][d], params["ff_b"][d])
        h1 = jax.nn.gelu(xn2 @ params["w1"][d] + params["b1"][d],
                         approximate=False)
        x = h1 @ params["w2"][d] + params["b2"][d] + x
    return x


if __name__ == "__main__":
    dim, depth, heads, dim_head, mlp_dim = 32, 2, 4, 16, 64
    N, M = 8, 8  # query tokens (x) and key/value tokens (y)

    key = jax.random.PRNGKey(0)
    kx, ky, kp = jax.random.split(key, 3)
    x = jax.random.normal(kx, (N, dim), jnp.float32)
    y = jax.random.normal(ky, (M, dim), jnp.float32)
    params = init_params(kp, dim=dim, depth=depth, heads=heads,
                         dim_head=dim_head, mlp_dim=mlp_dim)

    out = transformer_forward(x, y, params, heads=heads, dim_head=dim_head)
    out = jax.block_until_ready(out)

    ref = reference_forward(x, y, params, heads=heads, dim_head=dim_head)
    assert out.shape == (N, dim) and out.dtype == jnp.float32
    # Tolerance covers bf16 MXU operands, tanh GELU, and the EUP approx
    # reciprocal vs. the exact-f32 reference.
    assert jnp.allclose(out, ref, rtol=2e-2, atol=2e-2), "mismatch vs reference"
    print("KERNEL_OK")
</pallas_src>

<mosaic_0001>
module attributes {stable_mosaic.version = 11 : i64} {
  func.func @transformer_kernel(%arg0: i32, %arg1: memref<8x32xf32, #tpu.memory_space<vmem>>, %arg2: memref<8x32xf32, #tpu.memory_space<vmem>>, %arg3: memref<2x8x64xf32, #tpu.memory_space<vmem>>, %arg4: memref<2x32x64xbf16, #tpu.memory_space<vmem>>, %arg5: memref<2x32x128xbf16, #tpu.memory_space<vmem>>, %arg6: memref<2x64x32xbf16, #tpu.memory_space<vmem>>, %arg7: memref<2x32x64xbf16, #tpu.memory_space<vmem>>, %arg8: memref<2x64x32xbf16, #tpu.memory_space<vmem>>, %arg9: memref<8x32xf32, #tpu.memory_space<vmem>>) attributes {dimension_semantics = [#tpu.dimension_semantics<parallel>], iteration_bounds = array<i64: 1>, scalar_prefetch = 0 : i64, scratch_operands = 0 : i64, tpu.core_type = #tpu.core_type<tc>, window_params = [{transform_indices = @transform_0, window_bounds = array<i64: 8, 32>}, {pipeline_mode = #tpu.pipeline_mode<synchronous>, transform_indices = @transform_1, window_bounds = array<i64: 8, 32>}, {pipeline_mode = #tpu.pipeline_mode<synchronous>, transform_indices = @transform_2, window_bounds = array<i64: 2, 8, 64>}, {pipeline_mode = #tpu.pipeline_mode<synchronous>, transform_indices = @transform_3, window_bounds = array<i64: 2, 32, 64>}, {pipeline_mode = #tpu.pipeline_mode<synchronous>, transform_indices = @transform_4, window_bounds = array<i64: 2, 32, 128>}, {pipeline_mode = #tpu.pipeline_mode<synchronous>, transform_indices = @transform_5, window_bounds = array<i64: 2, 64, 32>}, {pipeline_mode = #tpu.pipeline_mode<synchronous>, transform_indices = @transform_6, window_bounds = array<i64: 2, 32, 64>}, {pipeline_mode = #tpu.pipeline_mode<synchronous>, transform_indices = @transform_7, window_bounds = array<i64: 2, 64, 32>}, {transform_indices = @transform_8, window_bounds = array<i64: 8, 32>}]} {
    %c0 = arith.constant 0 : index
    %c0_0 = arith.constant 0 : index
    %0 = vector.load %arg1[%c0, %c0_0] : memref<8x32xf32, #tpu.memory_space<vmem>>, vector<8x32xf32>
    %c0_1 = arith.constant 0 : index
    %c0_2 = arith.constant 0 : index
    %1 = vector.load %arg2[%c0_1, %c0_2] : memref<8x32xf32, #tpu.memory_space<vmem>>, vector<8x32xf32>
    %c0_3 = arith.constant 0 : index
    %c0_4 = arith.constant 0 : index
    %c0_5 = arith.constant 0 : index
    %2 = vector.load %arg3[%c0_3, %c0_4, %c0_5] : memref<2x8x64xf32, #tpu.memory_space<vmem>>, vector<1x8x64xf32>
    %3 = vector.shape_cast %2 : vector<1x8x64xf32> to vector<8x64xf32>
    %4 = vector.extract_strided_slice %3 {offsets = [0, 0], sizes = [1, 32], strides = [1, 1]} : vector<8x64xf32> to vector<1x32xf32>
    %5 = vector.extract_strided_slice %3 {offsets = [1, 0], sizes = [1, 32], strides = [1, 1]} : vector<8x64xf32> to vector<1x32xf32>
    %6 = vector.extract_strided_slice %3 {offsets = [2, 0], sizes = [1, 32], strides = [1, 1]} : vector<8x64xf32> to vector<1x32xf32>
    %7 = vector.extract_strided_slice %3 {offsets = [3, 0], sizes = [1, 32], strides = [1, 1]} : vector<8x64xf32> to vector<1x32xf32>
    %8 = vector.extract_strided_slice %3 {offsets = [4, 0], sizes = [1, 32], strides = [1, 1]} : vector<8x64xf32> to vector<1x32xf32>
    %9 = vector.extract_strided_slice %3 {offsets = [5, 0], sizes = [1, 64], strides = [1, 1]} : vector<8x64xf32> to vector<1x64xf32>
    %10 = vector.extract_strided_slice %3 {offsets = [6, 0], sizes = [1, 32], strides = [1, 1]} : vector<8x64xf32> to vector<1x32xf32>
    %cst = arith.constant dense<0.000000e+00> : vector<8xf32>
    %11 = vector.multi_reduction <add>, %0, %cst [1] : vector<8x32xf32> to vector<8xf32>
    %12 = vector.shape_cast %11 : vector<8xf32> to vector<8x1xf32>
    %cst_6 = arith.constant 3.200000e+01 : f32
    %13 = vector.broadcast %cst_6 : f32 to vector<8x1xf32>
    %14 = arith.divf %12, %13 : vector<8x1xf32>
    %15 = vector.broadcast %14 : vector<8x1xf32> to vector<8x32xf32>
    %16 = arith.subf %0, %15 : vector<8x32xf32>
    %17 = arith.mulf %16, %16 : vector<8x32xf32>
    %cst_7 = arith.constant dense<0.000000e+00> : vector<8xf32>
    %18 = vector.multi_reduction <add>, %17, %cst_7 [1] : vector<8x32xf32> to vector<8xf32>
    %19 = vector.shape_cast %18 : vector<8xf32> to vector<8x1xf32>
    %cst_8 = arith.constant 3.200000e+01 : f32
    %20 = vector.broadcast %cst_8 : f32 to vector<8x1xf32>
    %21 = arith.divf %19, %20 : vector<8x1xf32>
    %22 = vector.broadcast %14 : vector<8x1xf32> to vector<8x32xf32>
    %23 = arith.subf %0, %22 : vector<8x32xf32>
    %cst_9 = arith.constant 9.99999974E-6 : f32
    %24 = vector.broadcast %cst_9 : f32 to vector<8x1xf32>
    %25 = arith.addf %21, %24 : vector<8x1xf32>
    %26 = math.rsqrt %25 : vector<8x1xf32>
    %27 = vector.broadcast %26 : vector<8x1xf32> to vector<8x32xf32>
    %28 = arith.mulf %23, %27 : vector<8x32xf32>
    %29 = vector.broadcast %4 : vector<1x32xf32> to vector<8x32xf32>
    %30 = arith.mulf %28, %29 : vector<8x32xf32>
    %31 = vector.broadcast %5 : vector<1x32xf32> to vector<8x32xf32>
    %32 = arith.addf %30, %31 : vector<8x32xf32>
    %cst_10 = arith.constant dense<0.000000e+00> : vector<8xf32>
    %33 = vector.multi_reduction <add>, %1, %cst_10 [1] : vector<8x32xf32> to vector<8xf32>
    %34 = vector.shape_cast %33 : vector<8xf32> to vector<8x1xf32>
    %cst_11 = arith.constant 3.200000e+01 : f32
    %35 = vector.broadcast %cst_11 : f32 to vector<8x1xf32>
    %36 = arith.divf %34, %35 : vector<8x1xf32>
    %37 = vector.broadcast %36 : vector<8x1xf32> to vector<8x32xf32>
    %38 = arith.subf %1, %37 : vector<8x32xf32>
    %39 = arith.mulf %38, %38 : vector<8x32xf32>
    %cst_12 = arith.constant dense<0.000000e+00> : vector<8xf32>
    %40 = vector.multi_reduction <add>, %39, %cst_12 [1] : vector<8x32xf32> to vector<8xf32>
    %41 = vector.shape_cast %40 : vector<8xf32> to vector<8x1xf32>
    %cst_13 = arith.constant 3.200000e+01 : f32
    %42 = vector.broadcast %cst_13 : f32 to vector<8x1xf32>
    %43 = arith.divf %41, %42 : vector<8x1xf32>
    %44 = vector.broadcast %36 : vector<8x1xf32> to vector<8x32xf32>
    %45 = arith.subf %1, %44 : vector<8x32xf32>
    %cst_14 = arith.constant 9.99999974E-6 : f32
    %46 = vector.broadcast %cst_14 : f32 to vector<8x1xf32>
    %47 = arith.addf %43, %46 : vector<8x1xf32>
    %48 = math.rsqrt %47 : vector<8x1xf32>
    %49 = vector.broadcast %48 : vector<8x1xf32> to vector<8x32xf32>
    %50 = arith.mulf %45, %49 : vector<8x32xf32>
    %51 = vector.broadcast %4 : vector<1x32xf32> to vector<8x32xf32>
    %52 = arith.mulf %50, %51 : vector<8x32xf32>
    %53 = vector.broadcast %5 : vector<1x32xf32> to vector<8x32xf32>
    %54 = arith.addf %52, %53 : vector<8x32xf32>
    %55 = arith.truncf %32 : vector<8x32xf32> to vector<8x32xbf16>
    %c0_15 = arith.constant 0 : index
    %c0_16 = arith.constant 0 : index
    %c0_17 = arith.constant 0 : index
    %56 = vector.load %arg4[%c0_15, %c0_16, %c0_17] : memref<2x32x64xbf16, #tpu.memory_space<vmem>>, vector<1x32x64xbf16>
    %57 = vector.shape_cast %56 : vector<1x32x64xbf16> to vector<32x64xbf16>
    %cst_18 = arith.constant dense<0.000000e+00> : vector<8x64xf32>
    %58 = tpu.matmul %55, %57, %cst_18 {dimension_numbers = #tpu.dot_dimension_numbers<[1], [0], [0], [1], [0, 0, 1, 1], [], []>} : vector<8x32xbf16>, vector<32x64xbf16>, vector<8x64xf32> -> vector<8x64xf32>
    %59 = arith.truncf %54 : vector<8x32xf32> to vector<8x32xbf16>
    %c0_19 = arith.constant 0 : index
    %c0_20 = arith.constant 0 : index
    %c0_21 = arith.constant 0 : index
    %60 = vector.load %arg5[%c0_19, %c0_20, %c0_21] : memref<2x32x128xbf16, #tpu.memory_space<vmem>>, vector<1x32x128xbf16>
    %61 = vector.shape_cast %60 : vector<1x32x128xbf16> to vector<32x128xbf16>
    %cst_22 = arith.constant dense<0.000000e+00> : vector<8x128xf32>
    %62 = tpu.matmul %59, %61, %cst_22 {dimension_numbers = #tpu.dot_dimension_numbers<[1], [0], [0], [1], [0, 0, 1, 1], [], []>} : vector<8x32xbf16>, vector<32x128xbf16>, vector<8x128xf32> -> vector<8x128xf32>
    %63 = vector.extract_strided_slice %58 {offsets = [0, 0], sizes = [8, 16], strides = [1, 1]} : vector<8x64xf32> to vector<8x16xf32>
    %64 = arith.truncf %63 : vector<8x16xf32> to vector<8x16xbf16>
    %65 = vector.extract_strided_slice %62 {offsets = [0, 0], sizes = [8, 16], strides = [1, 1]} : vector<8x128xf32> to vector<8x16xf32>
    %66 = arith.truncf %65 : vector<8x16xf32> to vector<8x16xbf16>
    %67 = vector.extract_strided_slice %62 {offsets = [0, 64], sizes = [8, 16], strides = [1, 1]} : vector<8x128xf32> to vector<8x16xf32>
    %68 = arith.truncf %67 : vector<8x16xf32> to vector<8x16xbf16>
    %cst_23 = arith.constant dense<0.000000e+00> : vector<8x8xf32>
    %69 = tpu.matmul %64, %66, %cst_23 {dimension_numbers = #tpu.dot_dimension_numbers<[1], [1], [0], [0], [0, 0, 1, 0], [], []>} : vector<8x16xbf16>, vector<8x16xbf16>, vector<8x8xf32> -> vector<8x8xf32>
    %cst_24 = arith.constant dense<0xFF800000> : vector<8xf32>
    %70 = vector.multi_reduction <maximumf>, %69, %cst_24 [1] : vector<8x8xf32> to vector<8xf32>
    %71 = vector.shape_cast %70 : vector<8xf32> to vector<8x1xf32>
    %72 = vector.broadcast %71 : vector<8x1xf32> to vector<8x8xf32>
    %73 = arith.subf %69, %72 : vector<8x8xf32>
    %74 = math.exp %73 : vector<8x8xf32>
    %cst_25 = arith.constant dense<0.000000e+00> : vector<8xf32>
    %75 = vector.multi_reduction <add>, %74, %cst_25 [1] : vector<8x8xf32> to vector<8xf32>
    %76 = vector.shape_cast %75 : vector<8xf32> to vector<8x1xf32>
    %77 = tpu.reciprocal %76 {approx = true} : vector<8x1xf32> -> vector<8x1xf32>
    %78 = vector.broadcast %77 : vector<8x1xf32> to vector<8x8xf32>
    %79 = arith.mulf %74, %78 : vector<8x8xf32>
    %80 = arith.truncf %79 : vector<8x8xf32> to vector<8x8xbf16>
    %cst_26 = arith.constant dense<0.000000e+00> : vector<8x16xf32>
    %81 = tpu.matmul %80, %68, %cst_26 {dimension_numbers = #tpu.dot_dimension_numbers<[1], [0], [0], [1], [0, 0, 1, 1], [], []>} : vector<8x8xbf16>, vector<8x16xbf16>, vector<8x16xf32> -> vector<8x16xf32>
    %82 = vector.extract_strided_slice %58 {offsets = [0, 16], sizes = [8, 16], strides = [1, 1]} : vector<8x64xf32> to vector<8x16xf32>
    %83 = arith.truncf %82 : vector<8x16xf32> to vector<8x16xbf16>
    %84 = vector.extract_strided_slice %62 {offsets = [0, 16], sizes = [8, 16], strides = [1, 1]} : vector<8x128xf32> to vector<8x16xf32>
    %85 = arith.truncf %84 : vector<8x16xf32> to vector<8x16xbf16>
    %86 = vector.extract_strided_slice %62 {offsets = [0, 80], sizes = [8, 16], strides = [1, 1]} : vector<8x128xf32> to vector<8x16xf32>
    %87 = arith.truncf %86 : vector<8x16xf32> to vector<8x16xbf16>
    %cst_27 = arith.constant dense<0.000000e+00> : vector<8x8xf32>
    %88 = tpu.matmul %83, %85, %cst_27 {dimension_numbers = #tpu.dot_dimension_numbers<[1], [1], [0], [0], [0, 0, 1, 0], [], []>} : vector<8x16xbf16>, vector<8x16xbf16>, vector<8x8xf32> -> vector<8x8xf32>
    %cst_28 = arith.constant dense<0xFF800000> : vector<8xf32>
    %89 = vector.multi_reduction <maximumf>, %88, %cst_28 [1] : vector<8x8xf32> to vector<8xf32>
    %90 = vector.shape_cast %89 : vector<8xf32> to vector<8x1xf32>
    %91 = vector.broadcast %90 : vector<8x1xf32> to vector<8x8xf32>
    %92 = arith.subf %88, %91 : vector<8x8xf32>
    %93 = math.exp %92 : vector<8x8xf32>
    %cst_29 = arith.constant dense<0.000000e+00> : vector<8xf32>
    %94 = vector.multi_reduction <add>, %93, %cst_29 [1] : vector<8x8xf32> to vector<8xf32>
    %95 = vector.shape_cast %94 : vector<8xf32> to vector<8x1xf32>
    %96 = tpu.reciprocal %95 {approx = true} : vector<8x1xf32> -> vector<8x1xf32>
    %97 = vector.broadcast %96 : vector<8x1xf32> to vector<8x8xf32>
    %98 = arith.mulf %93, %97 : vector<8x8xf32>
    %99 = arith.truncf %98 : vector<8x8xf32> to vector<8x8xbf16>
    %cst_30 = arith.constant dense<0.000000e+00> : vector<8x16xf32>
    %100 = tpu.matmul %99, %87, %cst_30 {dimension_numbers = #tpu.dot_dimension_numbers<[1], [0], [0], [1], [0, 0, 1, 1], [], []>} : vector<8x8xbf16>, vector<8x16xbf16>, vector<8x16xf32> -> vector<8x16xf32>
    %101 = vector.extract_strided_slice %58 {offsets = [0, 32], sizes = [8, 16], strides = [1, 1]} : vector<8x64xf32> to vector<8x16xf32>
    %102 = arith.truncf %101 : vector<8x16xf32> to vector<8x16xbf16>
    %103 = vector.extract_strided_slice %62 {offsets = [0, 32], sizes = [8, 16], strides = [1, 1]} : vector<8x128xf32> to vector<8x16xf32>
    %104 = arith.truncf %103 : vector<8x16xf32> to vector<8x16xbf16>
    %105 = vector.extract_strided_slice %62 {offsets = [0, 96], sizes = [8, 16], strides = [1, 1]} : vector<8x128xf32> to vector<8x16xf32>
    %106 = arith.truncf %105 : vector<8x16xf32> to vector<8x16xbf16>
    %cst_31 = arith.constant dense<0.000000e+00> : vector<8x8xf32>
    %107 = tpu.matmul %102, %104, %cst_31 {dimension_numbers = #tpu.dot_dimension_numbers<[1], [1], [0], [0], [0, 0, 1, 0], [], []>} : vector<8x16xbf16>, vector<8x16xbf16>, vector<8x8xf32> -> vector<8x8xf32>
    %cst_32 = arith.constant dense<0xFF800000> : vector<8xf32>
    %108 = vector.multi_reduction <maximumf>, %107, %cst_32 [1] : vector<8x8xf32> to vector<8xf32>
    %109 = vector.shape_cast %108 : vector<8xf32> to vector<8x1xf32>
    %110 = vector.broadcast %109 : vector<8x1xf32> to vector<8x8xf32>
    %111 = arith.subf %107, %110 : vector<8x8xf32>
    %112 = math.exp %111 : vector<8x8xf32>
    %cst_33 = arith.constant dense<0.000000e+00> : vector<8xf32>
    %113 = vector.multi_reduction <add>, %112, %cst_33 [1] : vector<8x8xf32> to vector<8xf32>
    %114 = vector.shape_cast %113 : vector<8xf32> to vector<8x1xf32>
    %115 = tpu.reciprocal %114 {approx = true} : vector<8x1xf32> -> vector<8x1xf32>
    %116 = vector.broadcast %115 : vector<8x1xf32> to vector<8x8xf32>
    %117 = arith.mulf %112, %116 : vector<8x8xf32>
    %118 = arith.truncf %117 : vector<8x8xf32> to vector<8x8xbf16>
    %cst_34 = arith.constant dense<0.000000e+00> : vector<8x16xf32>
    %119 = tpu.matmul %118, %106, %cst_34 {dimension_numbers = #tpu.dot_dimension_numbers<[1], [0], [0], [1], [0, 0, 1, 1], [], []>} : vector<8x8xbf16>, vector<8x16xbf16>, vector<8x16xf32> -> vector<8x16xf32>
    %120 = vector.extract_strided_slice %58 {offsets = [0, 48], sizes = [8, 16], strides = [1, 1]} : vector<8x64xf32> to vector<8x16xf32>
    %121 = arith.truncf %120 : vector<8x16xf32> to vector<8x16xbf16>
    %122 = vector.extract_strided_slice %62 {offsets = [0, 48], sizes = [8, 16], strides = [1, 1]} : vector<8x128xf32> to vector<8x16xf32>
    %123 = arith.truncf %122 : vector<8x16xf32> to vector<8x16xbf16>
    %124 = vector.extract_strided_slice %62 {offsets = [0, 112], sizes = [8, 16], strides = [1, 1]} : vector<8x128xf32> to vector<8x16xf32>
    %125 = arith.truncf %124 : vector<8x16xf32> to vector<8x16xbf16>
    %cst_35 = arith.constant dense<0.000000e+00> : vector<8x8xf32>
    %126 = tpu.matmul %121, %123, %cst_35 {dimension_numbers = #tpu.dot_dimension_numbers<[1], [1], [0], [0], [0, 0, 1, 0], [], []>} : vector<8x16xbf16>, vector<8x16xbf16>, vector<8x8xf32> -> vector<8x8xf32>
    %cst_36 = arith.constant dense<0xFF800000> : vector<8xf32>
    %127 = vector.multi_reduction <maximumf>, %126, %cst_36 [1] : vector<8x8xf32> to vector<8xf32>
    %128 = vector.shape_cast %127 : vector<8xf32> to vector<8x1xf32>
    %129 = vector.broadcast %128 : vector<8x1xf32> to vector<8x8xf32>
    %130 = arith.subf %126, %129 : vector<8x8xf32>
    %131 = math.exp %130 : vector<8x8xf32>
    %cst_37 = arith.constant dense<0.000000e+00> : vector<8xf32>
    %132 = vector.multi_reduction <add>, %131, %cst_37 [1] : vector<8x8xf32> to vector<8xf32>
    %133 = vector.shape_cast %132 : vector<8xf32> to vector<8x1xf32>
    %134 = tpu.reciprocal %133 {approx = true} : vector<8x1xf32> -> vector<8x1xf32>
    %135 = vector.broadcast %134 : vector<8x1xf32> to vector<8x8xf32>
    %136 = arith.mulf %131, %135 : vector<8x8xf32>
    %137 = arith.truncf %136 : vector<8x8xf32> to vector<8x8xbf16>
    %cst_38 = arith.constant dense<0.000000e+00> : vector<8x16xf32>
    %138 = tpu.matmul %137, %125, %cst_38 {dimension_numbers = #tpu.dot_dimension_numbers<[1], [0], [0], [1], [0, 0, 1, 1], [], []>} : vector<8x8xbf16>, vector<8x16xbf16>, vector<8x16xf32> -> vector<8x16xf32>
    %139 = tpu.concatenate %81, %100, %119, %138 in 1 : vector<8x16xf32>, vector<8x16xf32>, vector<8x16xf32>, vector<8x16xf32> -> vector<8x64xf32>
    %140 = arith.truncf %139 : vector<8x64xf32> to vector<8x64xbf16>
    %c0_39 = arith.constant 0 : index
    %c0_40 = arith.constant 0 : index
    %c0_41 = arith.constant 0 : index
    %141 = vector.load %arg6[%c0_39, %c0_40, %c0_41] : memref<2x64x32xbf16, #tpu.memory_space<vmem>>, vector<1x64x32xbf16>
    %142 = vector.shape_cast %141 : vector<1x64x32xbf16> to vector<64x32xbf16>
    %cst_42 = arith.constant dense<0.000000e+00> : vector<8x32xf32>
    %143 = tpu.matmul %140, %142, %cst_42 {dimension_numbers = #tpu.dot_dimension_numbers<[1], [0], [0], [1], [0, 0, 1, 1], [], []>} : vector<8x64xbf16>, vector<64x32xbf16>, vector<8x32xf32> -> vector<8x32xf32>
    %144 = vector.broadcast %6 : vector<1x32xf32> to vector<8x32xf32>
    %145 = arith.addf %143, %144 : vector<8x32xf32>
    %146 = arith.addf %145, %0 : vector<8x32xf32>
    %cst_43 = arith.constant dense<0.000000e+00> : vector<8xf32>
    %147 = vector.multi_reduction <add>, %146, %cst_43 [1] : vector<8x32xf32> to vector<8xf32>
    %148 = vector.shape_cast %147 : vector<8xf32> to vector<8x1xf32>
    %cst_44 = arith.constant 3.200000e+01 : f32
    %149 = vector.broadcast %cst_44 : f32 to vector<8x1xf32>
    %150 = arith.divf %148, %149 : vector<8x1xf32>
    %151 = vector.broadcast %150 : vector<8x1xf32> to vector<8x32xf32>
    %152 = arith.subf %146, %151 : vector<8x32xf32>
    %153 = arith.mulf %152, %152 : vector<8x32xf32>
    %cst_45 = arith.constant dense<0.000000e+00> : vector<8xf32>
    %154 = vector.multi_reduction <add>, %153, %cst_45 [1] : vector<8x32xf32> to vector<8xf32>
    %155 = vector.shape_cast %154 : vector<8xf32> to vector<8x1xf32>
    %cst_46 = arith.constant 3.200000e+01 : f32
    %156 = vector.broadcast %cst_46 : f32 to vector<8x1xf32>
    %157 = arith.divf %155, %156 : vector<8x1xf32>
    %158 = vector.broadcast %150 : vector<8x1xf32> to vector<8x32xf32>
    %159 = arith.subf %146, %158 : vector<8x32xf32>
    %cst_47 = arith.constant 9.99999974E-6 : f32
    %160 = vector.broadcast %cst_47 : f32 to vector<8x1xf32>
    %161 = arith.addf %157, %160 : vector<8x1xf32>
    %162 = math.rsqrt %161 : vector<8x1xf32>
    %163 = vector.broadcast %162 : vector<8x1xf32> to vector<8x32xf32>
    %164 = arith.mulf %159, %163 : vector<8x32xf32>
    %165 = vector.broadcast %7 : vector<1x32xf32> to vector<8x32xf32>
    %166 = arith.mulf %164, %165 : vector<8x32xf32>
    %167 = vector.broadcast %8 : vector<1x32xf32> to vector<8x32xf32>
    %168 = arith.addf %166, %167 : vector<8x32xf32>
    %169 = arith.truncf %168 : vector<8x32xf32> to vector<8x32xbf16>
    %c0_48 = arith.constant 0 : index
    %c0_49 = arith.constant 0 : index
    %c0_50 = arith.constant 0 : index
    %170 = vector.load %arg7[%c0_48, %c0_49, %c0_50] : memref<2x32x64xbf16, #tpu.memory_space<vmem>>, vector<1x32x64xbf16>
    %171 = vector.shape_cast %170 : vector<1x32x64xbf16> to vector<32x64xbf16>
    %cst_51 = arith.constant dense<0.000000e+00> : vector<8x64xf32>
    %172 = tpu.matmul %169, %171, %cst_51 {dimension_numbers = #tpu.dot_dimension_numbers<[1], [0], [0], [1], [0, 0, 1, 1], [], []>} : vector<8x32xbf16>, vector<32x64xbf16>, vector<8x64xf32> -> vector<8x64xf32>
    %173 = vector.broadcast %9 : vector<1x64xf32> to vector<8x64xf32>
    %174 = arith.addf %172, %173 : vector<8x64xf32>
    %175 = arith.mulf %174, %174 : vector<8x64xf32>
    %176 = arith.mulf %174, %175 : vector<8x64xf32>
    %cst_52 = arith.constant 4.471500e-02 : f32
    %177 = vector.broadcast %cst_52 : f32 to vector<8x64xf32>
    %178 = arith.mulf %177, %176 : vector<8x64xf32>
    %179 = arith.addf %174, %178 : vector<8x64xf32>
    %cst_53 = arith.constant 0.797884583 : f32
    %180 = vector.broadcast %cst_53 : f32 to vector<8x64xf32>
    %181 = arith.mulf %180, %179 : vector<8x64xf32>
    %182 = math.tanh %181 : vector<8x64xf32>
    %cst_54 = arith.constant 1.000000e+00 : f32
    %183 = vector.broadcast %cst_54 : f32 to vector<8x64xf32>
    %184 = arith.addf %183, %182 : vector<8x64xf32>
    %cst_55 = arith.constant 5.000000e-01 : f32
    %185 = vector.broadcast %cst_55 : f32 to vector<8x64xf32>
    %186 = arith.mulf %185, %184 : vector<8x64xf32>
    %187 = arith.mulf %174, %186 : vector<8x64xf32>
    %188 = arith.truncf %187 : vector<8x64xf32> to vector<8x64xbf16>
    %c0_56 = arith.constant 0 : index
    %c0_57 = arith.constant 0 : index
    %c0_58 = arith.constant 0 : index
    %189 = vector.load %arg8[%c0_56, %c0_57, %c0_58] : memref<2x64x32xbf16, #tpu.memory_space<vmem>>, vector<1x64x32xbf16>
    %190 = vector.shape_cast %189 : vector<1x64x32xbf16> to vector<64x32xbf16>
    %cst_59 = arith.constant dense<0.000000e+00> : vector<8x32xf32>
    %191 = tpu.matmul %188, %190, %cst_59 {dimension_numbers = #tpu.dot_dimension_numbers<[1], [0], [0], [1], [0, 0, 1, 1], [], []>} : vector<8x64xbf16>, vector<64x32xbf16>, vector<8x32xf32> -> vector<8x32xf32>
    %192 = vector.broadcast %10 : vector<1x32xf32> to vector<8x32xf32>
    %193 = arith.addf %191, %192 : vector<8x32xf32>
    %194 = arith.addf %193, %146 : vector<8x32xf32>
    %c1 = arith.constant 1 : index
    %c0_60 = arith.constant 0 : index
    %c0_61 = arith.constant 0 : index
    %195 = vector.load %arg3[%c1, %c0_60, %c0_61] : memref<2x8x64xf32, #tpu.memory_space<vmem>>, vector<1x8x64xf32>
    %196 = vector.shape_cast %195 : vector<1x8x64xf32> to vector<8x64xf32>
    %197 = vector.extract_strided_slice %196 {offsets = [0, 0], sizes = [1, 32], strides = [1, 1]} : vector<8x64xf32> to vector<1x32xf32>
    %198 = vector.extract_strided_slice %196 {offsets = [1, 0], sizes = [1, 32], strides = [1, 1]} : vector<8x64xf32> to vector<1x32xf32>
    %199 = vector.extract_strided_slice %196 {offsets = [2, 0], sizes = [1, 32], strides = [1, 1]} : vector<8x64xf32> to vector<1x32xf32>
    %200 = vector.extract_strided_slice %196 {offsets = [3, 0], sizes = [1, 32], strides = [1, 1]} : vector<8x64xf32> to vector<1x32xf32>
    %201 = vector.extract_strided_slice %196 {offsets = [4, 0], sizes = [1, 32], strides = [1, 1]} : vector<8x64xf32> to vector<1x32xf32>
    %202 = vector.extract_strided_slice %196 {offsets = [5, 0], sizes = [1, 64], strides = [1, 1]} : vector<8x64xf32> to vector<1x64xf32>
    %203 = vector.extract_strided_slice %196 {offsets = [6, 0], sizes = [1, 32], strides = [1, 1]} : vector<8x64xf32> to vector<1x32xf32>
    %cst_62 = arith.constant dense<0.000000e+00> : vector<8xf32>
    %204 = vector.multi_reduction <add>, %194, %cst_62 [1] : vector<8x32xf32> to vector<8xf32>
    %205 = vector.shape_cast %204 : vector<8xf32> to vector<8x1xf32>
    %cst_63 = arith.constant 3.200000e+01 : f32
    %206 = vector.broadcast %cst_63 : f32 to vector<8x1xf32>
    %207 = arith.divf %205, %206 : vector<8x1xf32>
    %208 = vector.broadcast %207 : vector<8x1xf32> to vector<8x32xf32>
    %209 = arith.subf %194, %208 : vector<8x32xf32>
    %210 = arith.mulf %209, %209 : vector<8x32xf32>
    %cst_64 = arith.constant dense<0.000000e+00> : vector<8xf32>
    %211 = vector.multi_reduction <add>, %210, %cst_64 [1] : vector<8x32xf32> to vector<8xf32>
    %212 = vector.shape_cast %211 : vector<8xf32> to vector<8x1xf32>
    %cst_65 = arith.constant 3.200000e+01 : f32
    %213 = vector.broadcast %cst_65 : f32 to vector<8x1xf32>
    %214 = arith.divf %212, %213 : vector<8x1xf32>
    %215 = vector.broadcast %207 : vector<8x1xf32> to vector<8x32xf32>
    %216 = arith.subf %194, %215 : vector<8x32xf32>
    %cst_66 = arith.constant 9.99999974E-6 : f32
    %217 = vector.broadcast %cst_66 : f32 to vector<8x1xf32>
    %218 = arith.addf %214, %217 : vector<8x1xf32>
    %219 = math.rsqrt %218 : vector<8x1xf32>
    %220 = vector.broadcast %219 : vector<8x1xf32> to vector<8x32xf32>
    %221 = arith.mulf %216, %220 : vector<8x32xf32>
    %222 = vector.broadcast %197 : vector<1x32xf32> to vector<8x32xf32>
    %223 = arith.mulf %221, %222 : vector<8x32xf32>
    %224 = vector.broadcast %198 : vector<1x32xf32> to vector<8x32xf32>
    %225 = arith.addf %223, %224 : vector<8x32xf32>
    %cst_67 = arith.constant dense<0.000000e+00> : vector<8xf32>
    %226 = vector.multi_reduction <add>, %1, %cst_67 [1] : vector<8x32xf32> to vector<8xf32>
    %227 = vector.shape_cast %226 : vector<8xf32> to vector<8x1xf32>
    %cst_68 = arith.constant 3.200000e+01 : f32
    %228 = vector.broadcast %cst_68 : f32 to vector<8x1xf32>
    %229 = arith.divf %227, %228 : vector<8x1xf32>
    %230 = vector.broadcast %229 : vector<8x1xf32> to vector<8x32xf32>
    %231 = arith.subf %1, %230 : vector<8x32xf32>
    %232 = arith.mulf %231, %231 : vector<8x32xf32>
    %cst_69 = arith.constant dense<0.000000e+00> : vector<8xf32>
    %233 = vector.multi_reduction <add>, %232, %cst_69 [1] : vector<8x32xf32> to vector<8xf32>
    %234 = vector.shape_cast %233 : vector<8xf32> to vector<8x1xf32>
    %cst_70 = arith.constant 3.200000e+01 : f32
    %235 = vector.broadcast %cst_70 : f32 to vector<8x1xf32>
    %236 = arith.divf %234, %235 : vector<8x1xf32>
    %237 = vector.broadcast %229 : vector<8x1xf32> to vector<8x32xf32>
    %238 = arith.subf %1, %237 : vector<8x32xf32>
    %cst_71 = arith.constant 9.99999974E-6 : f32
    %239 = vector.broadcast %cst_71 : f32 to vector<8x1xf32>
    %240 = arith.addf %236, %239 : vector<8x1xf32>
    %241 = math.rsqrt %240 : vector<8x1xf32>
    %242 = vector.broadcast %241 : vector<8x1xf32> to vector<8x32xf32>
    %243 = arith.mulf %238, %242 : vector<8x32xf32>
    %244 = vector.broadcast %197 : vector<1x32xf32> to vector<8x32xf32>
    %245 = arith.mulf %243, %244 : vector<8x32xf32>
    %246 = vector.broadcast %198 : vector<1x32xf32> to vector<8x32xf32>
    %247 = arith.addf %245, %246 : vector<8x32xf32>
    %248 = arith.truncf %225 : vector<8x32xf32> to vector<8x32xbf16>
    %c1_72 = arith.constant 1 : index
    %c0_73 = arith.constant 0 : index
    %c0_74 = arith.constant 0 : index
    %249 = vector.load %arg4[%c1_72, %c0_73, %c0_74] : memref<2x32x64xbf16, #tpu.memory_space<vmem>>, vector<1x32x64xbf16>
    %250 = vector.shape_cast %249 : vector<1x32x64xbf16> to vector<32x64xbf16>
    %cst_75 = arith.constant dense<0.000000e+00> : vector<8x64xf32>
    %251 = tpu.matmul %248, %250, %cst_75 {dimension_numbers = #tpu.dot_dimension_numbers<[1], [0], [0], [1], [0, 0, 1, 1], [], []>} : vector<8x32xbf16>, vector<32x64xbf16>, vector<8x64xf32> -> vector<8x64xf32>
    %252 = arith.truncf %247 : vector<8x32xf32> to vector<8x32xbf16>
    %c1_76 = arith.constant 1 : index
    %c0_77 = arith.constant 0 : index
    %c0_78 = arith.constant 0 : index
    %253 = vector.load %arg5[%c1_76, %c0_77, %c0_78] : memref<2x32x128xbf16, #tpu.memory_space<vmem>>, vector<1x32x128xbf16>
    %254 = vector.shape_cast %253 : vector<1x32x128xbf16> to vector<32x128xbf16>
    %cst_79 = arith.constant dense<0.000000e+00> : vector<8x128xf32>
    %255 = tpu.matmul %252, %254, %cst_79 {dimension_numbers = #tpu.dot_dimension_numbers<[1], [0], [0], [1], [0, 0, 1, 1], [], []>} : vector<8x32xbf16>, vector<32x128xbf16>, vector<8x128xf32> -> vector<8x128xf32>
    %256 = vector.extract_strided_slice %251 {offsets = [0, 0], sizes = [8, 16], strides = [1, 1]} : vector<8x64xf32> to vector<8x16xf32>
    %257 = arith.truncf %256 : vector<8x16xf32> to vector<8x16xbf16>
    %258 = vector.extract_strided_slice %255 {offsets = [0, 0], sizes = [8, 16], strides = [1, 1]} : vector<8x128xf32> to vector<8x16xf32>
    %259 = arith.truncf %258 : vector<8x16xf32> to vector<8x16xbf16>
    %260 = vector.extract_strided_slice %255 {offsets = [0, 64], sizes = [8, 16], strides = [1, 1]} : vector<8x128xf32> to vector<8x16xf32>
    %261 = arith.truncf %260 : vector<8x16xf32> to vector<8x16xbf16>
    %cst_80 = arith.constant dense<0.000000e+00> : vector<8x8xf32>
    %262 = tpu.matmul %257, %259, %cst_80 {dimension_numbers = #tpu.dot_dimension_numbers<[1], [1], [0], [0], [0, 0, 1, 0], [], []>} : vector<8x16xbf16>, vector<8x16xbf16>, vector<8x8xf32> -> vector<8x8xf32>
    %cst_81 = arith.constant dense<0xFF800000> : vector<8xf32>
    %263 = vector.multi_reduction <maximumf>, %262, %cst_81 [1] : vector<8x8xf32> to vector<8xf32>
    %264 = vector.shape_cast %263 : vector<8xf32> to vector<8x1xf32>
    %265 = vector.broadcast %264 : vector<8x1xf32> to vector<8x8xf32>
    %266 = arith.subf %262, %265 : vector<8x8xf32>
    %267 = math.exp %266 : vector<8x8xf32>
    %cst_82 = arith.constant dense<0.000000e+00> : vector<8xf32>
    %268 = vector.multi_reduction <add>, %267, %cst_82 [1] : vector<8x8xf32> to vector<8xf32>
    %269 = vector.shape_cast %268 : vector<8xf32> to vector<8x1xf32>
    %270 = tpu.reciprocal %269 {approx = true} : vector<8x1xf32> -> vector<8x1xf32>
    %271 = vector.broadcast %270 : vector<8x1xf32> to vector<8x8xf32>
    %272 = arith.mulf %267, %271 : vector<8x8xf32>
    %273 = arith.truncf %272 : vector<8x8xf32> to vector<8x8xbf16>
    %cst_83 = arith.constant dense<0.000000e+00> : vector<8x16xf32>
    %274 = tpu.matmul %273, %261, %cst_83 {dimension_numbers = #tpu.dot_dimension_numbers<[1], [0], [0], [1], [0, 0, 1, 1], [], []>} : vector<8x8xbf16>, vector<8x16xbf16>, vector<8x16xf32> -> vector<8x16xf32>
    %275 = vector.extract_strided_slice %251 {offsets = [0, 16], sizes = [8, 16], strides = [1, 1]} : vector<8x64xf32> to vector<8x16xf32>
    %276 = arith.truncf %275 : vector<8x16xf32> to vector<8x16xbf16>
    %277 = vector.extract_strided_slice %255 {offsets = [0, 16], sizes = [8, 16], strides = [1, 1]} : vector<8x128xf32> to vector<8x16xf32>
    %278 = arith.truncf %277 : vector<8x16xf32> to vector<8x16xbf16>
    %279 = vector.extract_strided_slice %255 {offsets = [0, 80], sizes = [8, 16], strides = [1, 1]} : vector<8x128xf32> to vector<8x16xf32>
    %280 = arith.truncf %279 : vector<8x16xf32> to vector<8x16xbf16>
    %cst_84 = arith.constant dense<0.000000e+00> : vector<8x8xf32>
    %281 = tpu.matmul %276, %278, %cst_84 {dimension_numbers = #tpu.dot_dimension_numbers<[1], [1], [0], [0], [0, 0, 1, 0], [], []>} : vector<8x16xbf16>, vector<8x16xbf16>, vector<8x8xf32> -> vector<8x8xf32>
    %cst_85 = arith.constant dense<0xFF800000> : vector<8xf32>
    %282 = vector.multi_reduction <maximumf>, %281, %cst_85 [1] : vector<8x8xf32> to vector<8xf32>
    %283 = vector.shape_cast %282 : vector<8xf32> to vector<8x1xf32>
    %284 = vector.broadcast %283 : vector<8x1xf32> to vector<8x8xf32>
    %285 = arith.subf %281, %284 : vector<8x8xf32>
    %286 = math.exp %285 : vector<8x8xf32>
    %cst_86 = arith.constant dense<0.000000e+00> : vector<8xf32>
    %287 = vector.multi_reduction <add>, %286, %cst_86 [1] : vector<8x8xf32> to vector<8xf32>
    %288 = vector.shape_cast %287 : vector<8xf32> to vector<8x1xf32>
    %289 = tpu.reciprocal %288 {approx = true} : vector<8x1xf32> -> vector<8x1xf32>
    %290 = vector.broadcast %289 : vector<8x1xf32> to vector<8x8xf32>
    %291 = arith.mulf %286, %290 : vector<8x8xf32>
    %292 = arith.truncf %291 : vector<8x8xf32> to vector<8x8xbf16>
    %cst_87 = arith.constant dense<0.000000e+00> : vector<8x16xf32>
    %293 = tpu.matmul %292, %280, %cst_87 {dimension_numbers = #tpu.dot_dimension_numbers<[1], [0], [0], [1], [0, 0, 1, 1], [], []>} : vector<8x8xbf16>, vector<8x16xbf16>, vector<8x16xf32> -> vector<8x16xf32>
    %294 = vector.extract_strided_slice %251 {offsets = [0, 32], sizes = [8, 16], strides = [1, 1]} : vector<8x64xf32> to vector<8x16xf32>
    %295 = arith.truncf %294 : vector<8x16xf32> to vector<8x16xbf16>
    %296 = vector.extract_strided_slice %255 {offsets = [0, 32], sizes = [8, 16], strides = [1, 1]} : vector<8x128xf32> to vector<8x16xf32>
    %297 = arith.truncf %296 : vector<8x16xf32> to vector<8x16xbf16>
    %298 = vector.extract_strided_slice %255 {offsets = [0, 96], sizes = [8, 16], strides = [1, 1]} : vector<8x128xf32> to vector<8x16xf32>
    %299 = arith.truncf %298 : vector<8x16xf32> to vector<8x16xbf16>
    %cst_88 = arith.constant dense<0.000000e+00> : vector<8x8xf32>
    %300 = tpu.matmul %295, %297, %cst_88 {dimension_numbers = #tpu.dot_dimension_numbers<[1], [1], [0], [0], [0, 0, 1, 0], [], []>} : vector<8x16xbf16>, vector<8x16xbf16>, vector<8x8xf32> -> vector<8x8xf32>
    %cst_89 = arith.constant dense<0xFF800000> : vector<8xf32>
    %301 = vector.multi_reduction <maximumf>, %300, %cst_89 [1] : vector<8x8xf32> to vector<8xf32>
    %302 = vector.shape_cast %301 : vector<8xf32> to vector<8x1xf32>
    %303 = vector.broadcast %302 : vector<8x1xf32> to vector<8x8xf32>
    %304 = arith.subf %300, %303 : vector<8x8xf32>
    %305 = math.exp %304 : vector<8x8xf32>
    %cst_90 = arith.constant dense<0.000000e+00> : vector<8xf32>
    %306 = vector.multi_reduction <add>, %305, %cst_90 [1] : vector<8x8xf32> to vector<8xf32>
    %307 = vector.shape_cast %306 : vector<8xf32> to vector<8x1xf32>
    %308 = tpu.reciprocal %307 {approx = true} : vector<8x1xf32> -> vector<8x1xf32>
    %309 = vector.broadcast %308 : vector<8x1xf32> to vector<8x8xf32>
    %310 = arith.mulf %305, %309 : vector<8x8xf32>
    %311 = arith.truncf %310 : vector<8x8xf32> to vector<8x8xbf16>
    %cst_91 = arith.constant dense<0.000000e+00> : vector<8x16xf32>
    %312 = tpu.matmul %311, %299, %cst_91 {dimension_numbers = #tpu.dot_dimension_numbers<[1], [0], [0], [1], [0, 0, 1, 1], [], []>} : vector<8x8xbf16>, vector<8x16xbf16>, vector<8x16xf32> -> vector<8x16xf32>
    %313 = vector.extract_strided_slice %251 {offsets = [0, 48], sizes = [8, 16], strides = [1, 1]} : vector<8x64xf32> to vector<8x16xf32>
    %314 = arith.truncf %313 : vector<8x16xf32> to vector<8x16xbf16>
    %315 = vector.extract_strided_slice %255 {offsets = [0, 48], sizes = [8, 16], strides = [1, 1]} : vector<8x128xf32> to vector<8x16xf32>
    %316 = arith.truncf %315 : vector<8x16xf32> to vector<8x16xbf16>
    %317 = vector.extract_strided_slice %255 {offsets = [0, 112], sizes = [8, 16], strides = [1, 1]} : vector<8x128xf32> to vector<8x16xf32>
    %318 = arith.truncf %317 : vector<8x16xf32> to vector<8x16xbf16>
    %cst_92 = arith.constant dense<0.000000e+00> : vector<8x8xf32>
    %319 = tpu.matmul %314, %316, %cst_92 {dimension_numbers = #tpu.dot_dimension_numbers<[1], [1], [0], [0], [0, 0, 1, 0], [], []>} : vector<8x16xbf16>, vector<8x16xbf16>, vector<8x8xf32> -> vector<8x8xf32>
    %cst_93 = arith.constant dense<0xFF800000> : vector<8xf32>
    %320 = vector.multi_reduction <maximumf>, %319, %cst_93 [1] : vector<8x8xf32> to vector<8xf32>
    %321 = vector.shape_cast %320 : vector<8xf32> to vector<8x1xf32>
    %322 = vector.broadcast %321 : vector<8x1xf32> to vector<8x8xf32>
    %323 = arith.subf %319, %322 : vector<8x8xf32>
    %324 = math.exp %323 : vector<8x8xf32>
    %cst_94 = arith.constant dense<0.000000e+00> : vector<8xf32>
    %325 = vector.multi_reduction <add>, %324, %cst_94 [1] : vector<8x8xf32> to vector<8xf32>
    %326 = vector.shape_cast %325 : vector<8xf32> to vector<8x1xf32>
    %327 = tpu.reciprocal %326 {approx = true} : vector<8x1xf32> -> vector<8x1xf32>
    %328 = vector.broadcast %327 : vector<8x1xf32> to vector<8x8xf32>
    %329 = arith.mulf %324, %328 : vector<8x8xf32>
    %330 = arith.truncf %329 : vector<8x8xf32> to vector<8x8xbf16>
    %cst_95 = arith.constant dense<0.000000e+00> : vector<8x16xf32>
    %331 = tpu.matmul %330, %318, %cst_95 {dimension_numbers = #tpu.dot_dimension_numbers<[1], [0], [0], [1], [0, 0, 1, 1], [], []>} : vector<8x8xbf16>, vector<8x16xbf16>, vector<8x16xf32> -> vector<8x16xf32>
    %332 = tpu.concatenate %274, %293, %312, %331 in 1 : vector<8x16xf32>, vector<8x16xf32>, vector<8x16xf32>, vector<8x16xf32> -> vector<8x64xf32>
    %333 = arith.truncf %332 : vector<8x64xf32> to vector<8x64xbf16>
    %c1_96 = arith.constant 1 : index
    %c0_97 = arith.constant 0 : index
    %c0_98 = arith.constant 0 : index
    %334 = vector.load %arg6[%c1_96, %c0_97, %c0_98] : memref<2x64x32xbf16, #tpu.memory_space<vmem>>, vector<1x64x32xbf16>
    %335 = vector.shape_cast %334 : vector<1x64x32xbf16> to vector<64x32xbf16>
    %cst_99 = arith.constant dense<0.000000e+00> : vector<8x32xf32>
    %336 = tpu.matmul %333, %335, %cst_99 {dimension_numbers = #tpu.dot_dimension_numbers<[1], [0], [0], [1], [0, 0, 1, 1], [], []>} : vector<8x64xbf16>, vector<64x32xbf16>, vector<8x32xf32> -> vector<8x32xf32>
    %337 = vector.broadcast %199 : vector<1x32xf32> to vector<8x32xf32>
    %338 = arith.addf %336, %337 : vector<8x32xf32>
    %339 = arith.addf %338, %194 : vector<8x32xf32>
    %cst_100 = arith.constant dense<0.000000e+00> : vector<8xf32>
    %340 = vector.multi_reduction <add>, %339, %cst_100 [1] : vector<8x32xf32> to vector<8xf32>
    %341 = vector.shape_cast %340 : vector<8xf32> to vector<8x1xf32>
    %cst_101 = arith.constant 3.200000e+01 : f32
    %342 = vector.broadcast %cst_101 : f32 to vector<8x1xf32>
    %343 = arith.divf %341, %342 : vector<8x1xf32>
    %344 = vector.broadcast %343 : vector<8x1xf32> to vector<8x32xf32>
    %345 = arith.subf %339, %344 : vector<8x32xf32>
    %346 = arith.mulf %345, %345 : vector<8x32xf32>
    %cst_102 = arith.constant dense<0.000000e+00> : vector<8xf32>
    %347 = vector.multi_reduction <add>, %346, %cst_102 [1] : vector<8x32xf32> to vector<8xf32>
    %348 = vector.shape_cast %347 : vector<8xf32> to vector<8x1xf32>
    %cst_103 = arith.constant 3.200000e+01 : f32
    %349 = vector.broadcast %cst_103 : f32 to vector<8x1xf32>
    %350 = arith.divf %348, %349 : vector<8x1xf32>
    %351 = vector.broadcast %343 : vector<8x1xf32> to vector<8x32xf32>
    %352 = arith.subf %339, %351 : vector<8x32xf32>
    %cst_104 = arith.constant 9.99999974E-6 : f32
    %353 = vector.broadcast %cst_104 : f32 to vector<8x1xf32>
    %354 = arith.addf %350, %353 : vector<8x1xf32>
    %355 = math.rsqrt %354 : vector<8x1xf32>
    %356 = vector.broadcast %355 : vector<8x1xf32> to vector<8x32xf32>
    %357 = arith.mulf %352, %356 : vector<8x32xf32>
    %358 = vector.broadcast %200 : vector<1x32xf32> to vector<8x32xf32>
    %359 = arith.mulf %357, %358 : vector<8x32xf32>
    %360 = vector.broadcast %201 : vector<1x32xf32> to vector<8x32xf32>
    %361 = arith.addf %359, %360 : vector<8x32xf32>
    %362 = arith.truncf %361 : vector<8x32xf32> to vector<8x32xbf16>
    %c1_105 = arith.constant 1 : index
    %c0_106 = arith.constant 0 : index
    %c0_107 = arith.constant 0 : index
    %363 = vector.load %arg7[%c1_105, %c0_106, %c0_107] : memref<2x32x64xbf16, #tpu.memory_space<vmem>>, vector<1x32x64xbf16>
    %364 = vector.shape_cast %363 : vector<1x32x64xbf16> to vector<32x64xbf16>
    %cst_108 = arith.constant dense<0.000000e+00> : vector<8x64xf32>
    %365 = tpu.matmul %362, %364, %cst_108 {dimension_numbers = #tpu.dot_dimension_numbers<[1], [0], [0], [1], [0, 0, 1, 1], [], []>} : vector<8x32xbf16>, vector<32x64xbf16>, vector<8x64xf32> -> vector<8x64xf32>
    %366 = vector.broadcast %202 : vector<1x64xf32> to vector<8x64xf32>
    %367 = arith.addf %365, %366 : vector<8x64xf32>
    %368 = arith.mulf %367, %367 : vector<8x64xf32>
    %369 = arith.mulf %367, %368 : vector<8x64xf32>
    %cst_109 = arith.constant 4.471500e-02 : f32
    %370 = vector.broadcast %cst_109 : f32 to vector<8x64xf32>
    %371 = arith.mulf %370, %369 : vector<8x64xf32>
    %372 = arith.addf %367, %371 : vector<8x64xf32>
    %cst_110 = arith.constant 0.797884583 : f32
    %373 = vector.broadcast %cst_110 : f32 to vector<8x64xf32>
    %374 = arith.mulf %373, %372 : vector<8x64xf32>
    %375 = math.tanh %374 : vector<8x64xf32>
    %cst_111 = arith.constant 1.000000e+00 : f32
    %376 = vector.broadcast %cst_111 : f32 to vector<8x64xf32>
    %377 = arith.addf %376, %375 : vector<8x64xf32>
    %cst_112 = arith.constant 5.000000e-01 : f32
    %378 = vector.broadcast %cst_112 : f32 to vector<8x64xf32>
    %379 = arith.mulf %378, %377 : vector<8x64xf32>
    %380 = arith.mulf %367, %379 : vector<8x64xf32>
    %381 = arith.truncf %380 : vector<8x64xf32> to vector<8x64xbf16>
    %c1_113 = arith.constant 1 : index
    %c0_114 = arith.constant 0 : index
    %c0_115 = arith.constant 0 : index
    %382 = vector.load %arg8[%c1_113, %c0_114, %c0_115] : memref<2x64x32xbf16, #tpu.memory_space<vmem>>, vector<1x64x32xbf16>
    %383 = vector.shape_cast %382 : vector<1x64x32xbf16> to vector<64x32xbf16>
    %cst_116 = arith.constant dense<0.000000e+00> : vector<8x32xf32>
    %384 = tpu.matmul %381, %383, %cst_116 {dimension_numbers = #tpu.dot_dimension_numbers<[1], [0], [0], [1], [0, 0, 1, 1], [], []>} : vector<8x64xbf16>, vector<64x32xbf16>, vector<8x32xf32> -> vector<8x32xf32>
    %385 = vector.broadcast %203 : vector<1x32xf32> to vector<8x32xf32>
    %386 = arith.addf %384, %385 : vector<8x32xf32>
    %387 = arith.addf %386, %339 : vector<8x32xf32>
    %c0_117 = arith.constant 0 : index
    %c0_118 = arith.constant 0 : index
    %388 = vector.load %arg9[%c0_117, %c0_118] : memref<8x32xf32, #tpu.memory_space<vmem>>, vector<8x32xf32>
    tpu.vector_store %arg9[%c0_117, %c0_118], %387 {strides = array<i32>} : memref<8x32xf32, #tpu.memory_space<vmem>>, vector<8x32xf32>,
    return
  }
  func.func @transform_0(%arg0: i32) -> (i32, i32) {
    %c0_i32 = arith.constant 0 : i32
    %c0_i32_0 = arith.constant 0 : i32
    return %arg0, %c0_i32 : i32, i32
  }
  func.func @transform_1(%arg0: i32) -> (i32, i32) {
    %c0_i32 = arith.constant 0 : i32
    %c0_i32_0 = arith.constant 0 : i32
    %c0_i32_1 = arith.constant 0 : i32
    return %c0_i32, %c0_i32_0 : i32, i32
  }
  func.func @transform_2(%arg0: i32) -> (i32, i32, i32) {
    %c0_i32 = arith.constant 0 : i32
    %c0_i32_0 = arith.constant 0 : i32
    %c0_i32_1 = arith.constant 0 : i32
    %c0_i32_2 = arith.constant 0 : i32
    return %c0_i32, %c0_i32_0, %c0_i32_1 : i32, i32, i32
  }
  func.func @transform_3(%arg0: i32) -> (i32, i32, i32) {
    %c0_i32 = arith.constant 0 : i32
    %c0_i32_0 = arith.constant 0 : i32
    %c0_i32_1 = arith.constant 0 : i32
    %c0_i32_2 = arith.constant 0 : i32
    return %c0_i32, %c0_i32_0, %c0_i32_1 : i32, i32, i32
  }
  func.func @transform_4(%arg0: i32) -> (i32, i32, i32) {
    %c0_i32 = arith.constant 0 : i32
    %c0_i32_0 = arith.constant 0 : i32
    %c0_i32_1 = arith.constant 0 : i32
    %c0_i32_2 = arith.constant 0 : i32
    return %c0_i32, %c0_i32_0, %c0_i32_1 : i32, i32, i32
  }
  func.func @transform_5(%arg0: i32) -> (i32, i32, i32) {
    %c0_i32 = arith.constant 0 : i32
    %c0_i32_0 = arith.constant 0 : i32
    %c0_i32_1 = arith.constant 0 : i32
    %c0_i32_2 = arith.constant 0 : i32
    return %c0_i32, %c0_i32_0, %c0_i32_1 : i32, i32, i32
  }
  func.func @transform_6(%arg0: i32) -> (i32, i32, i32) {
    %c0_i32 = arith.constant 0 : i32
    %c0_i32_0 = arith.constant 0 : i32
    %c0_i32_1 = arith.constant 0 : i32
    %c0_i32_2 = arith.constant 0 : i32
    return %c0_i32, %c0_i32_0, %c0_i32_1 : i32, i32, i32
  }
  func.func @transform_7(%arg0: i32) -> (i32, i32, i32) {
    %c0_i32 = arith.constant 0 : i32
    %c0_i32_0 = arith.constant 0 : i32
    %c0_i32_1 = arith.constant 0 : i32
    %c0_i32_2 = arith.constant 0 : i32
    return %c0_i32, %c0_i32_0, %c0_i32_1 : i32, i32, i32
  }
  func.func @transform_8(%arg0: i32) -> (i32, i32) {
    %c0_i32 = arith.constant 0 : i32
    %c0_i32_0 = arith.constant 0 : i32
    return %arg0, %c0_i32 : i32, i32
  }
}

</mosaic_0001>

<llo_original>
// kernel: tpu_custom_call.1
$region0: #{tpu_custom_call.1}
  #allocation0 [shape = 'u32[]', space=smem, size = 0x4, offset = 0x4, fixed_abs, tag = 'smem constant byte address 0x4 - core index']
  #allocation1 [shape = 'u32[144,128]{1,0:T(1,128)}', space=vmem, size = 0x12000, scoped, tag = 'internal scratch']
  %s0 = inlined_call_operand.vmem [shape: f32[8,32], index: 0, kind: input, shape index: {}]
  %s1 = inlined_call_operand.vmem [shape: f32[8,32], index: 1, kind: input, shape index: {}]
  %s2 = inlined_call_operand.vmem [shape: f32[2,8,64], index: 2, kind: input, shape index: {}]
  %s3 = inlined_call_operand.vmem [shape: bf16[2,32,64], index: 3, kind: input, shape index: {}]
  %s4 = inlined_call_operand.vmem [shape: bf16[2,32,128], index: 4, kind: input, shape index: {}]
  %s5 = inlined_call_operand.vmem [shape: bf16[2,64,32], index: 5, kind: input, shape index: {}]
  %s6 = inlined_call_operand.vmem [shape: bf16[2,32,64], index: 6, kind: input, shape index: {}]
  %s7 = inlined_call_operand.vmem [shape: bf16[2,64,32], index: 7, kind: input, shape index: {}]
  %s8 = inlined_call_operand.hbm [shape: f32[8,32], index: 8, kind: output, shape index: {}]
  %s9 = sld [smem:[#allocation0]]
  $region42: #{tpu_custom_call.1} parent=0
    _
  %s11 = ssub.s32 1, %s9
  %s12 = scalar_select 0, %s11, %s9
  $region1: #{tpu_custom_call.1} parent=0
    #allocation2 [shape = 'u8[4096]{0}', space=vmem, size = 0x1000, scoped, tag = 'output window, operand 0, single buffered']
    #allocation3 [shape = 's32[1]{0}', space=sflag, size = 0x4, scoped, tag = 'scoped memory for tpu_custom_call.1']
    %13 = vsyncpa [#allocation3], 0
    // Predicated region
    $region2: #{tpu_custom_call.1} parent=1 // pred_check
      _
    $region3: #{tpu_custom_call.1} parent=1 // pred_check_branch
      %15 = sbr.rel (0) target = $region5
    $region4: #{tpu_custom_call.1} parent=1 // pred_region
      _
    $region5: #{tpu_custom_call.1} parent=1 // pred_fallthru
      _
    // Predicated region
    $region6: #{tpu_custom_call.1} parent=1 // pred_check
      _
    $region7: #{tpu_custom_call.1} parent=1 // pred_check_branch
      %17 = sbr.rel (0) target = $region9
    $region8: #{tpu_custom_call.1} parent=1 // pred_region
      _
    $region9: #{tpu_custom_call.1} parent=1 // pred_fallthru
      _
    // Predicated region
    $region10: #{tpu_custom_call.1} parent=1 // pred_check
      _
    $region11: #{tpu_custom_call.1} parent=1 // pred_check_branch
      %19 = sbr.rel (0) target = $region13
    $region12: #{tpu_custom_call.1} parent=1 // pred_region
      _
    $region13: #{tpu_custom_call.1} parent=1 // pred_fallthru
      _
    // Predicated region
    $region14: #{tpu_custom_call.1} parent=1 // pred_check
      _
    $region15: #{tpu_custom_call.1} parent=1 // pred_check_branch
      %21 = sbr.rel (0) target = $region17
    $region16: #{tpu_custom_call.1} parent=1 // pred_region
      _
    $region17: #{tpu_custom_call.1} parent=1 // pred_fallthru
      _
    // Predicated region
    $region18: #{tpu_custom_call.1} parent=1 // pred_check
      _
    $region19: #{tpu_custom_call.1} parent=1 // pred_check_branch
      %23 = sbr.rel (0) target = $region21
    $region20: #{tpu_custom_call.1} parent=1 // pred_region
      _
    $region21: #{tpu_custom_call.1} parent=1 // pred_fallthru
      _
    // Predicated region
    $region22: #{tpu_custom_call.1} parent=1 // pred_check
      _
    $region23: #{tpu_custom_call.1} parent=1 // pred_check_branch
      %25 = sbr.rel (0) target = $region25
    $region24: #{tpu_custom_call.1} parent=1 // pred_region
      _
    $region25: #{tpu_custom_call.1} parent=1 // pred_fallthru
      _
    // Predicated region
    $region26: #{tpu_custom_call.1} parent=1 // pred_check
      _
    $region27: #{tpu_custom_call.1} parent=1 // pred_check_branch
      %27 = sbr.rel (0) target = $region29
    $region28: #{tpu_custom_call.1} parent=1 // pred_region
      _
    $region29: #{tpu_custom_call.1} parent=1 // pred_fallthru
      _
    // Predicated region
    $region30: #{tpu_custom_call.1} parent=1 // pred_check
      _
    $region31: #{tpu_custom_call.1} parent=1 // pred_check_branch
      %29 = sbr.rel (0) target = $region33
    $region32: #{tpu_custom_call.1} parent=1 // pred_region
      _
    $region33: #{tpu_custom_call.1} parent=1 // pred_fallthru
      _
    %v31 = vld [vmem:[%s0] sm:$0xff]
    %v32 = vld [vmem:[%s1] sm:$0xff]
    %v33 = vld [vmem:[%s2] sm:$0xff]
    %vm34 = vcmask 261120
    %v35 = vsel %vm34, %v31, 0.0
    %36 = vadd.xlane.f32.xlu0 %v35
    %v37 = vpop.xlane.xlu0 %36
    %v38 = vrcp.pop 32.0
    %v39 = vmul.f32 %v37, %v38
    %v40 = vsub.f32 %v31, %v39
    %v41 = vmul.f32 %v40, %v40
    %v42 = vsel %vm34, %v41, 0.0
    %43 = vadd.xlane.f32.xlu0 %v42
    %v44 = vpop.xlane.xlu0 %43
    %v45 = vmul.f32 %v44, %v38
    %v46 = vadd.f32 %v45, 1e-05
    %v47 = vrsqrt.pop %v46
    %v48 = vmul.f32 %v40, %v47
    %v49 = vlaneseq
    %v50 = vshrl.u32 %v49, 7
    %v51 = vsub.s32 0, %v50
    %v52 = vrot.slane %v33, %v51
    %v53 = vmul.f32 %v48, %v52
    %v54 = vlaneseq
    %v55 = vshrl.u32 %v54, 7
    %v56 = vsub.s32 1, %v55
    %v57 = vrot.slane %v33, %v56
    %v58 = vadd.f32 %v53, %v57
    %v59 = vsel %vm34, %v32, 0.0
    %60 = vadd.xlane.f32.xlu0 %v59
    %v61 = vpop.xlane.xlu0 %60
    %v62 = vmul.f32 %v61, %v38
    %v63 = vsub.f32 %v32, %v62
    %v64 = vmul.f32 %v63, %v63
    %v65 = vsel %vm34, %v64, 0.0
    %66 = vadd.xlane.f32.xlu0 %v65
    %v67 = vpop.xlane.xlu0 %66
    %v68 = vmul.f32 %v67, %v38
    %v69 = vadd.f32 %v68, 1e-05
    %v70 = vrsqrt.pop %v69
    %v71 = vmul.f32 %v63, %v70
    %v72 = vmul.f32 %v71, %v52
    %v73 = vadd.f32 %v72, %v57
    %v74 = vpack.c.bf16 %v58, %v58
    %v75 = vld [vmem:[%s3] sm:$0xf]
    %v76 = vld [vmem:[%s3 + $0x4] sm:$0xf]
    %v77 = vld [vmem:[%s3 + $0x8] sm:$0xf]
    %v78 = vld [vmem:[%s3 + $0xc] sm:$0xf]
    %v83 = vunpack.c.l.b16 %v75
    %v84 = vunpack.c.l.b16 %v76
    %v85 = vunpack.c.l.b16 %v77
    %v86 = vunpack.c.l.b16 %v78
    %v87 = vpack.c.b16 %v84, %v83
    %v88 = vpack.c.b16 %v86, %v85
    %v92 = vsel %vm34, %v74, 0
    %94 = vmatprep.subr.bf16.mxu0 0
    %95 = vmatpush1.bf16.msra.mxu0 0
    %96 = vmatprep.subr.bf16.mxu0 0
    %97 = vmatpush1.bf16.msra.mxu0 0
    %98 = vmatprep.subr.bf16.mxu0 0
    %99 = vmatpush1.bf16.msra.mxu0 0
    %100 = vmatprep.subr.bf16.mxu0 0
    %101 = vmatpush1.bf16.msra.mxu0 0
    %102 = vmatprep.subr.bf16.mxu0 0
    %103 = vmatpush1.bf16.msra.mxu0 0
    %104 = vmatprep.subr.bf16.mxu0 0
    %105 = vmatpush1.bf16.msra.mxu0 0
    %106 = vmatprep.subr.bf16.mxu0 0
    %107 = vmatpush1.bf16.msra.mxu0 %v88
    %108 = vmatprep.subr.bf16.mxu0 0
    %109 = vmatpush1.bf16.msra.mxu0 %v87
    %110 = vmatprep.subr.bf16.mxu0 0
    %111 = vmatpush2.bf16.msra.mxu0 0
    %112 = vmatprep.subr.bf16.mxu0 0
    %113 = vmatpush2.bf16.msra.mxu0 0
    %114 = vmatprep.subr.bf16.mxu0 0
    %115 = vmatpush2.bf16.msra.mxu0 0
    %116 = vmatprep.subr.bf16.mxu0 0
    %117 = vmatpush2.bf16.msra.mxu0 0
    %118 = vmatprep.subr.bf16.mxu0 0
    %119 = vmatpush2.bf16.msra.mxu0 0
    %120 = vmatprep.subr.bf16.mxu0 0
    %121 = vmatpush2.bf16.msra.mxu0 0
    %122 = vmatprep.subr.bf16.mxu0 0
    %123 = vmatpush2.bf16.msra.mxu0 0
    %124 = vmatprep.subr.bf16.mxu0 0
    %125 = vmatpush2.bf16.msra.mxu0 0
    %126 = vmatprep.mubr.bf16.mxu0 0
    %127 = vmatmul.mubr.bf16.gmra.mxu0 %v92
    %v128 = vpop.f32.mrf.mxu0
    %v129 = vadd.f32 0.0, %v128
    %v130 = vpop.f32.mrf.mxu0
    %v131 = vpop.f32.mrf.mxu0
    %v132 = vpop.f32.mrf.mxu0
    %133 = vdwg.mxu0
    %v134 = vpack.c.bf16 %v73, %v73
    %v135 = vld [vmem:[%s4] sm:$0xf]
    %v136 = vld [vmem:[%s4 + $0x4] sm:$0xf]
    %v137 = vld [vmem:[%s4 + $0x8] sm:$0xf]
    %v138 = vld [vmem:[%s4 + $0xc] sm:$0xf]
    %v143 = vunpack.c.l.b16 %v135
    %v144 = vunpack.c.l.b16 %v136
    %v145 = vunpack.c.l.b16 %v137
    %v146 = vunpack.c.l.b16 %v138
    %v147 = vpack.c.b16 %v144, %v143
    %v148 = vpack.c.b16 %v146, %v145
    %v152 = vsel %vm34, %v134, 0
    %154 = vmatprep.subr.bf16.mxu0 0
    %155 = vmatpush1.bf16.msra.mxu0 0
    %156 = vmatprep.subr.bf16.mxu0 0
    %157 = vmatpush1.bf16.msra.mxu0 0
    %158 = vmatprep.subr.bf16.mxu0 0
    %159 = vmatpush1.bf16.msra.mxu0 0
    %160 = vmatprep.subr.bf16.mxu0 0
    %161 = vmatpush1.bf16.msra.mxu0 0
    %162 = vmatprep.subr.bf16.mxu0 0
    %163 = vmatpush1.bf16.msra.mxu0 0
    %164 = vmatprep.subr.bf16.mxu0 0
    %165 = vmatpush1.bf16.msra.mxu0 0
    %166 = vmatprep.subr.bf16.mxu0 0
    %167 = vmatpush1.bf16.msra.mxu0 %v148
    %168 = vmatprep.subr.bf16.mxu0 0
    %169 = vmatpush1.bf16.msra.mxu0 %v147
    %170 = vmatprep.subr.bf16.mxu0 0
    %171 = vmatpush2.bf16.msra.mxu0 0
    %172 = vmatprep.subr.bf16.mxu0 0
    %173 = vmatpush2.bf16.msra.mxu0 0
    %174 = vmatprep.subr.bf16.mxu0 0
    %175 = vmatpush2.bf16.msra.mxu0 0
    %176 = vmatprep.subr.bf16.mxu0 0
    %177 = vmatpush2.bf16.msra.mxu0 0
    %178 = vmatprep.subr.bf16.mxu0 0
    %179 = vmatpush2.bf16.msra.mxu0 0
    %180 = vmatprep.subr.bf16.mxu0 0
    %181 = vmatpush2.bf16.msra.mxu0 0
    %182 = vmatprep.subr.bf16.mxu0 0
    %183 = vmatpush2.bf16.msra.mxu0 0
    %184 = vmatprep.subr.bf16.mxu0 0
    %185 = vmatpush2.bf16.msra.mxu0 0
    %186 = vmatprep.mubr.bf16.mxu0 0
    %187 = vmatmul.mubr.bf16.gmra.mxu0 %v152
    %v188 = vpop.f32.mrf.mxu0
    %v189 = vadd.f32 0.0, %v188
    %v190 = vpop.f32.mrf.mxu0
    %v191 = vpop.f32.mrf.mxu0
    %v192 = vpop.f32.mrf.mxu0
    %193 = vdwg.mxu0
    %v194 = vpack.c.bf16 %v129, %v129
    %v195 = vpack.c.bf16 %v189, %v189
    %vm196 = vcmask 130048
    %v198 = vsel %vm196, %v194, 0
    %v201 = vsel %vm196, %v195, 0
    %203 = vmatprep.subr.bf16.mxu0 0
    %204 = vmatpush1.bf16.xpose.msra.mxu0 0
    %205 = vmatprep.subr.bf16.mxu0 0
    %206 = vmatpush1.bf16.xpose.msra.mxu0 0
    %207 = vmatprep.subr.bf16.mxu0 0
    %208 = vmatpush1.bf16.xpose.msra.mxu0 0
    %209 = vmatprep.subr.bf16.mxu0 0
    %210 = vmatpush1.bf16.xpose.msra.mxu0 0
    %211 = vmatprep.subr.bf16.mxu0 0
    %212 = vmatpush1.bf16.xpose.msra.mxu0 0
    %213 = vmatprep.subr.bf16.mxu0 0
    %214 = vmatpush1.bf16.xpose.msra.mxu0 0
    %215 = vmatprep.subr.bf16.mxu0 0
    %216 = vmatpush1.bf16.xpose.msra.mxu0 0
    %217 = vmatprep.subr.bf16.mxu0 0
    %218 = vmatpush1.bf16.xpose.msra.mxu0 %v201
    %219 = vmatprep.subr.bf16.mxu0 0
    %220 = vmatpush2.bf16.xpose.msra.mxu0 0
    %221 = vmatprep.subr.bf16.mxu0 0
    %222 = vmatpush2.bf16.xpose.msra.mxu0 0
    %223 = vmatprep.subr.bf16.mxu0 0
    %224 = vmatpush2.bf16.xpose.msra.mxu0 0
    %225 = vmatprep.subr.bf16.mxu0 0
    %226 = vmatpush2.bf16.xpose.msra.mxu0 0
    %227 = vmatprep.subr.bf16.mxu0 0
    %228 = vmatpush2.bf16.xpose.msra.mxu0 0
    %229 = vmatprep.subr.bf16.mxu0 0
    %230 = vmatpush2.bf16.xpose.msra.mxu0 0
    %231 = vmatprep.subr.bf16.mxu0 0
    %232 = vmatpush2.bf16.xpose.msra.mxu0 0
    %233 = vmatprep.subr.bf16.mxu0 0
    %234 = vmatpush2.bf16.xpose.msra.mxu0 0
    %235 = vmatprep.mubr.bf16.mxu0 0
    %236 = vmatmul.mubr.bf16.gmra.mxu0 %v198
    %v237 = vpop.f32.mrf.mxu0
    %v238 = vadd.f32 0.0, %v237
    %v239 = vpop.f32.mrf.mxu0
    %v240 = vpop.f32.mrf.mxu0
    %v241 = vpop.f32.mrf.mxu0
    %242 = vdwg.mxu0
    %vm243 = vcmask 64512
    %v244 = vsel %vm243, %v238, -inf
    %245 = vmax.xlane.f32.xlu0 %v244
    %v246 = vpop.xlane.xlu0 %245
    %v247 = vsub.f32 %v238, %v246
    %v248 = vmul.f32 %v247, 1.442695
    %v249 = vpow.pop %v248
    %v250 = vsel %vm243, %v249, 0.0
    %251 = vadd.xlane.f32.xlu0 %v250
    %v252 = vpop.xlane.xlu0 %251
    %v253 = vrcp.pop %v252
    %v254 = vmul.f32 %v249, %v253
    %v255 = vpack.c.bf16 %v254, %v254
    %257 = vrot.lane.b32.xlu0 %v195, 64
    %v258 = vpop.permute.xlu0 %257
    %v260 = vsel %vm243, %v255, 0
    %vm262 = vcmask 1043456
    %v264 = vsel %vm262, %v258, 0
    %266 = vmatprep.subr.bf16.mxu0 0
    %267 = vmatpush1.bf16.msra.mxu0 0
    %268 = vmatprep.subr.bf16.mxu0 0
    %269 = vmatpush1.bf16.msra.mxu0 0
    %270 = vmatprep.subr.bf16.mxu0 0
    %271 = vmatpush1.bf16.msra.mxu0 0
    %272 = vmatprep.subr.bf16.mxu0 0
    %273 = vmatpush1.bf16.msra.mxu0 0
    %274 = vmatprep.subr.bf16.mxu0 0
    %275 = vmatpush1.bf16.msra.mxu0 0
    %276 = vmatprep.subr.bf16.mxu0 0
    %277 = vmatpush1.bf16.msra.mxu0 0
    %278 = vmatprep.subr.bf16.mxu0 0
    %279 = vmatpush1.bf16.msra.mxu0 0
    %280 = vmatprep.subr.bf16.mxu0 0
    %281 = vmatpush1.bf16.msra.mxu0 %v264
    %282 = vmatprep.subr.bf16.mxu0 0
    %283 = vmatpush2.bf16.msra.mxu0 0
    %284 = vmatprep.subr.bf16.mxu0 0
    %285 = vmatpush2.bf16.msra.mxu0 0
    %286 = vmatprep.subr.bf16.mxu0 0
    %287 = vmatpush2.bf16.msra.mxu0 0
    %288 = vmatprep.subr.bf16.mxu0 0
    %289 = vmatpush2.bf16.msra.mxu0 0
    %290 = vmatprep.subr.bf16.mxu0 0
    %291 = vmatpush2.bf16.msra.mxu0 0
    %292 = vmatprep.subr.bf16.mxu0 0
    %293 = vmatpush2.bf16.msra.mxu0 0
    %294 = vmatprep.subr.bf16.mxu0 0
    %295 = vmatpush2.bf16.msra.mxu0 0
    %296 = vmatprep.subr.bf16.mxu0 0
    %297 = vmatpush2.bf16.msra.mxu0 0
    %298 = vmatprep.mubr.bf16.mxu0 0
    %299 = vmatmul.mubr.bf16.gmra.mxu0 %v260
    %v300 = vpop.f32.mrf.mxu0
    %v301 = vadd.f32 0.0, %v300
    %v302 = vpop.f32.mrf.mxu0
    %v303 = vpop.f32.mrf.mxu0
    %v304 = vpop.f32.mrf.mxu0
    %305 = vdwg.mxu0
    %307 = vrot.lane.b32.xlu0 %v194, 112
    %v308 = vpop.permute.xlu0 %307
    %309 = vrot.lane.b32.xlu0 %v195, 112
    %v310 = vpop.permute.xlu0 %309
    %v312 = vsel %vm196, %v308, 0
    %v315 = vsel %vm196, %v310, 0
    %317 = vmatprep.subr.bf16.mxu0 0
    %318 = vmatpush1.bf16.xpose.msra.mxu0 0
    %319 = vmatprep.subr.bf16.mxu0 0
    %320 = vmatpush1.bf16.xpose.msra.mxu0 0
    %321 = vmatprep.subr.bf16.mxu0 0
    %322 = vmatpush1.bf16.xpose.msra.mxu0 0
    %323 = vmatprep.subr.bf16.mxu0 0
    %324 = vmatpush1.bf16.xpose.msra.mxu0 0
    %325 = vmatprep.subr.bf16.mxu0 0
    %326 = vmatpush1.bf16.xpose.msra.mxu0 0
    %327 = vmatprep.subr.bf16.mxu0 0
    %328 = vmatpush1.bf16.xpose.msra.mxu0 0
    %329 = vmatprep.subr.bf16.mxu0 0
    %330 = vmatpush1.bf16.xpose.msra.mxu0 0
    %331 = vmatprep.subr.bf16.mxu0 0
    %332 = vmatpush1.bf16.xpose.msra.mxu0 %v315
    %333 = vmatprep.subr.bf16.mxu0 0
    %334 = vmatpush2.bf16.xpose.msra.mxu0 0
    %335 = vmatprep.subr.bf16.mxu0 0
    %336 = vmatpush2.bf16.xpose.msra.mxu0 0
    %337 = vmatprep.subr.bf16.mxu0 0
    %338 = vmatpush2.bf16.xpose.msra.mxu0 0
    %339 = vmatprep.subr.bf16.mxu0 0
    %340 = vmatpush2.bf16.xpose.msra.mxu0 0
    %341 = vmatprep.subr.bf16.mxu0 0
    %342 = vmatpush2.bf16.xpose.msra.mxu0 0
    %343 = vmatprep.subr.bf16.mxu0 0
    %344 = vmatpush2.bf16.xpose.msra.mxu0 0
    %345 = vmatprep.subr.bf16.mxu0 0
    %346 = vmatpush2.bf16.xpose.msra.mxu0 0
    %347 = vmatprep.subr.bf16.mxu0 0
    %348 = vmatpush2.bf16.xpose.msra.mxu0 0
    %349 = vmatprep.mubr.bf16.mxu0 0
    %350 = vmatmul.mubr.bf16.gmra.mxu0 %v312
    %v351 = vpop.f32.mrf.mxu0
    %v352 = vadd.f32 0.0, %v351
    %v353 = vpop.f32.mrf.mxu0
    %v354 = vpop.f32.mrf.mxu0
    %v355 = vpop.f32.mrf.mxu0
    %356 = vdwg.mxu0
    %v357 = vsel %vm243, %v352, -inf
    %358 = vmax.xlane.f32.xlu0 %v357
    %v359 = vpop.xlane.xlu0 %358
    %v360 = vsub.f32 %v352, %v359
    %v361 = vmul.f32 %v360, 1.442695
    %v362 = vpow.pop %v361
    %v363 = vsel %vm243, %v362, 0.0
    %364 = vadd.xlane.f32.xlu0 %v363
    %v365 = vpop.xlane.xlu0 %364
    %v366 = vrcp.pop %v365
    %v367 = vmul.f32 %v362, %v366
    %v368 = vpack.c.bf16 %v367, %v367
    %369 = vrot.lane.b32.xlu0 %v195, 48
    %v370 = vpop.permute.xlu0 %369
    %v372 = vsel %vm243, %v368, 0
    %v375 = vsel %vm262, %v370, 0
    %377 = vmatprep.subr.bf16.mxu0 0
    %378 = vmatpush1.bf16.msra.mxu0 0
    %379 = vmatprep.subr.bf16.mxu0 0
    %380 = vmatpush1.bf16.msra.mxu0 0
    %381 = vmatprep.subr.bf16.mxu0 0
    %382 = vmatpush1.bf16.msra.mxu0 0
    %383 = vmatprep.subr.bf16.mxu0 0
    %384 = vmatpush1.bf16.msra.mxu0 0
    %385 = vmatprep.subr.bf16.mxu0 0
    %386 = vmatpush1.bf16.msra.mxu0 0
    %387 = vmatprep.subr.bf16.mxu0 0
    %388 = vmatpush1.bf16.msra.mxu0 0
    %389 = vmatprep.subr.bf16.mxu0 0
    %390 = vmatpush1.bf16.msra.mxu0 0
    %391 = vmatprep.subr.bf16.mxu0 0
    %392 = vmatpush1.bf16.msra.mxu0 %v375
    %393 = vmatprep.subr.bf16.mxu0 0
    %394 = vmatpush2.bf16.msra.mxu0 0
    %395 = vmatprep.subr.bf16.mxu0 0
    %396 = vmatpush2.bf16.msra.mxu0 0
    %397 = vmatprep.subr.bf16.mxu0 0
    %398 = vmatpush2.bf16.msra.mxu0 0
    %399 = vmatprep.subr.bf16.mxu0 0
    %400 = vmatpush2.bf16.msra.mxu0 0
    %401 = vmatprep.subr.bf16.mxu0 0
    %402 = vmatpush2.bf16.msra.mxu0 0
    %403 = vmatprep.subr.bf16.mxu0 0
    %404 = vmatpush2.bf16.msra.mxu0 0
    %405 = vmatprep.subr.bf16.mxu0 0
    %406 = vmatpush2.bf16.msra.mxu0 0
    %407 = vmatprep.subr.bf16.mxu0 0
    %408 = vmatpush2.bf16.msra.mxu0 0
    %409 = vmatprep.mubr.bf16.mxu0 0
    %410 = vmatmul.mubr.bf16.gmra.mxu0 %v372
    %v411 = vpop.f32.mrf.mxu0
    %v412 = vadd.f32 0.0, %v411
    %v413 = vpop.f32.mrf.mxu0
    %v414 = vpop.f32.mrf.mxu0
    %v415 = vpop.f32.mrf.mxu0
    %416 = vdwg.mxu0
    %417 = vrot.lane.b32.xlu0 %v194, 96
    %v418 = vpop.permute.xlu0 %417
    %419 = vrot.lane.b32.xlu0 %v195, 96
    %v420 = vpop.permute.xlu0 %419
    %v422 = vsel %vm196, %v418, 0
    %v425 = vsel %vm196, %v420, 0
    %427 = vmatprep.subr.bf16.mxu0 0
    %428 = vmatpush1.bf16.xpose.msra.mxu0 0
    %429 = vmatprep.subr.bf16.mxu0 0
    %430 = vmatpush1.bf16.xpose.msra.mxu0 0
    %431 = vmatprep.subr.bf16.mxu0 0
    %432 = vmatpush1.bf16.xpose.msra.mxu0 0
    %433 = vmatprep.subr.bf16.mxu0 0
    %434 = vmatpush1.bf16.xpose.msra.mxu0 0
    %435 = vmatprep.subr.bf16.mxu0 0
    %436 = vmatpush1.bf16.xpose.msra.mxu0 0
    %437 = vmatprep.subr.bf16.mxu0 0
    %438 = vmatpush1.bf16.xpose.msra.mxu0 0
    %439 = vmatprep.subr.bf16.mxu0 0
    %440 = vmatpush1.bf16.xpose.msra.mxu0 0
    %441 = vmatprep.subr.bf16.mxu0 0
    %442 = vmatpush1.bf16.xpose.msra.mxu0 %v425
    %443 = vmatprep.subr.bf16.mxu0 0
    %444 = vmatpush2.bf16.xpose.msra.mxu0 0
    %445 = vmatprep.subr.bf16.mxu0 0
    %446 = vmatpush2.bf16.xpose.msra.mxu0 0
    %447 = vmatprep.subr.bf16.mxu0 0
    %448 = vmatpush2.bf16.xpose.msra.mxu0 0
    %449 = vmatprep.subr.bf16.mxu0 0
    %450 = vmatpush2.bf16.xpose.msra.mxu0 0
    %451 = vmatprep.subr.bf16.mxu0 0
    %452 = vmatpush2.bf16.xpose.msra.mxu0 0
    %453 = vmatprep.subr.bf16.mxu0 0
    %454 = vmatpush2.bf16.xpose.msra.mxu0 0
    %455 = vmatprep.subr.bf16.mxu0 0
    %456 = vmatpush2.bf16.xpose.msra.mxu0 0
    %457 = vmatprep.subr.bf16.mxu0 0
    %458 = vmatpush2.bf16.xpose.msra.mxu0 0
    %459 = vmatprep.mubr.bf16.mxu0 0
    %460 = vmatmul.mubr.bf16.gmra.mxu0 %v422
    %v461 = vpop.f32.mrf.mxu0
    %v462 = vadd.f32 0.0, %v461
    %v463 = vpop.f32.mrf.mxu0
    %v464 = vpop.f32.mrf.mxu0
    %v465 = vpop.f32.mrf.mxu0
    %466 = vdwg.mxu0
    %v467 = vsel %vm243, %v462, -inf
    %468 = vmax.xlane.f32.xlu0 %v467
    %v469 = vpop.xlane.xlu0 %468
    %v470 = vsub.f32 %v462, %v469
    %v471 = vmul.f32 %v470, 1.442695
    %v472 = vpow.pop %v471
    %v473 = vsel %vm243, %v472, 0.0
    %474 = vadd.xlane.f32.xlu0 %v473
    %v475 = vpop.xlane.xlu0 %474
    %v476 = vrcp.pop %v475
    %v477 = vmul.f32 %v472, %v476
    %v478 = vpack.c.bf16 %v477, %v477
    %479 = vrot.lane.b32.xlu0 %v195, 32
    %v480 = vpop.permute.xlu0 %479
    %v482 = vsel %vm243, %v478, 0
    %v485 = vsel %vm262, %v480, 0
    %487 = vmatprep.subr.bf16.mxu0 0
    %488 = vmatpush1.bf16.msra.mxu0 0
    %489 = vmatprep.subr.bf16.mxu0 0
    %490 = vmatpush1.bf16.msra.mxu0 0
    %491 = vmatprep.subr.bf16.mxu0 0
    %492 = vmatpush1.bf16.msra.mxu0 0
    %493 = vmatprep.subr.bf16.mxu0 0
    %494 = vmatpush1.bf16.msra.mxu0 0
    %495 = vmatprep.subr.bf16.mxu0 0
    %496 = vmatpush1.bf16.msra.mxu0 0
    %497 = vmatprep.subr.bf16.mxu0 0
    %498 = vmatpush1.bf16.msra.mxu0 0
    %499 = vmatprep.subr.bf16.mxu0 0
    %500 = vmatpush1.bf16.msra.mxu0 0
    %501 = vmatprep.subr.bf16.mxu0 0
    %502 = vmatpush1.bf16.msra.mxu0 %v485
    %503 = vmatprep.subr.bf16.mxu0 0
    %504 = vmatpush2.bf16.msra.mxu0 0
    %505 = vmatprep.subr.bf16.mxu0 0
    %506 = vmatpush2.bf16.msra.mxu0 0
    %507 = vmatprep.subr.bf16.mxu0 0
    %508 = vmatpush2.bf16.msra.mxu0 0
    %509 = vmatprep.subr.bf16.mxu0 0
    %510 = vmatpush2.bf16.msra.mxu0 0
    %511 = vmatprep.subr.bf16.mxu0 0
    %512 = vmatpush2.bf16.msra.mxu0 0
    %513 = vmatprep.subr.bf16.mxu0 0
    %514 = vmatpush2.bf16.msra.mxu0 0
    %515 = vmatprep.subr.bf16.mxu0 0
    %516 = vmatpush2.bf16.msra.mxu0 0
    %517 = vmatprep.subr.bf16.mxu0 0
    %518 = vmatpush2.bf16.msra.mxu0 0
    %519 = vmatprep.mubr.bf16.mxu0 0
    %520 = vmatmul.mubr.bf16.gmra.mxu0 %v482
    %v521 = vpop.f32.mrf.mxu0
    %v522 = vadd.f32 0.0, %v521
    %v523 = vpop.f32.mrf.mxu0
    %v524 = vpop.f32.mrf.mxu0
    %v525 = vpop.f32.mrf.mxu0
    %526 = vdwg.mxu0
    %527 = vrot.lane.b32.xlu0 %v194, 80
    %v528 = vpop.permute.xlu0 %527
    %529 = vrot.lane.b32.xlu0 %v195, 80
    %v530 = vpop.permute.xlu0 %529
    %v532 = vsel %vm196, %v528, 0
    %v535 = vsel %vm196, %v530, 0
    %537 = vmatprep.subr.bf16.mxu0 0
    %538 = vmatpush1.bf16.xpose.msra.mxu0 0
    %539 = vmatprep.subr.bf16.mxu0 0
    %540 = vmatpush1.bf16.xpose.msra.mxu0 0
    %541 = vmatprep.subr.bf16.mxu0 0
    %542 = vmatpush1.bf16.xpose.msra.mxu0 0
    %543 = vmatprep.subr.bf16.mxu0 0
    %544 = vmatpush1.bf16.xpose.msra.mxu0 0
    %545 = vmatprep.subr.bf16.mxu0 0
    %546 = vmatpush1.bf16.xpose.msra.mxu0 0
    %547 = vmatprep.subr.bf16.mxu0 0
    %548 = vmatpush1.bf16.xpose.msra.mxu0 0
    %549 = vmatprep.subr.bf16.mxu0 0
    %550 = vmatpush1.bf16.xpose.msra.mxu0 0
    %551 = vmatprep.subr.bf16.mxu0 0
    %552 = vmatpush1.bf16.xpose.msra.mxu0 %v535
    %553 = vmatprep.subr.bf16.mxu0 0
    %554 = vmatpush2.bf16.xpose.msra.mxu0 0
    %555 = vmatprep.subr.bf16.mxu0 0
    %556 = vmatpush2.bf16.xpose.msra.mxu0 0
    %557 = vmatprep.subr.bf16.mxu0 0
    %558 = vmatpush2.bf16.xpose.msra.mxu0 0
    %559 = vmatprep.subr.bf16.mxu0 0
    %560 = vmatpush2.bf16.xpose.msra.mxu0 0
    %561 = vmatprep.subr.bf16.mxu0 0
    %562 = vmatpush2.bf16.xpose.msra.mxu0 0
    %563 = vmatprep.subr.bf16.mxu0 0
    %564 = vmatpush2.bf16.xpose.msra.mxu0 0
    %565 = vmatprep.subr.bf16.mxu0 0
    %566 = vmatpush2.bf16.xpose.msra.mxu0 0
    %567 = vmatprep.subr.bf16.mxu0 0
    %568 = vmatpush2.bf16.xpose.msra.mxu0 0
    %569 = vmatprep.mubr.bf16.mxu0 0
    %570 = vmatmul.mubr.bf16.gmra.mxu0 %v532
    %v571 = vpop.f32.mrf.mxu0
    %v572 = vadd.f32 0.0, %v571
    %v573 = vpop.f32.mrf.mxu0
    %v574 = vpop.f32.mrf.mxu0
    %v575 = vpop.f32.mrf.mxu0
    %576 = vdwg.mxu0
    %v577 = vsel %vm243, %v572, -inf
    %578 = vmax.xlane.f32.xlu0 %v577
    %v579 = vpop.xlane.xlu0 %578
    %v580 = vsub.f32 %v572, %v579
    %v581 = vmul.f32 %v580, 1.442695
    %v582 = vpow.pop %v581
    %v583 = vsel %vm243, %v582, 0.0
    %584 = vadd.xlane.f32.xlu0 %v583
    %v585 = vpop.xlane.xlu0 %584
    %v586 = vrcp.pop %v585
    %v587 = vmul.f32 %v582, %v586
    %v588 = vpack.c.bf16 %v587, %v587
    %589 = vrot.lane.b32.xlu0 %v195, 16
    %v590 = vpop.permute.xlu0 %589
    %v592 = vsel %vm243, %v588, 0
    %v595 = vsel %vm262, %v590, 0
    %597 = vmatprep.subr.bf16.mxu0 0
    %598 = vmatpush1.bf16.msra.mxu0 0
    %599 = vmatprep.subr.bf16.mxu0 0
    %600 = vmatpush1.bf16.msra.mxu0 0
    %601 = vmatprep.subr.bf16.mxu0 0
    %602 = vmatpush1.bf16.msra.mxu0 0
    %603 = vmatprep.subr.bf16.mxu0 0
    %604 = vmatpush1.bf16.msra.mxu0 0
    %605 = vmatprep.subr.bf16.mxu0 0
    %606 = vmatpush1.bf16.msra.mxu0 0
    %607 = vmatprep.subr.bf16.mxu0 0
    %608 = vmatpush1.bf16.msra.mxu0 0
    %609 = vmatprep.subr.bf16.mxu0 0
    %610 = vmatpush1.bf16.msra.mxu0 0
    %611 = vmatprep.subr.bf16.mxu0 0
    %612 = vmatpush1.bf16.msra.mxu0 %v595
    %613 = vmatprep.subr.bf16.mxu0 0
    %614 = vmatpush2.bf16.msra.mxu0 0
    %615 = vmatprep.subr.bf16.mxu0 0
    %616 = vmatpush2.bf16.msra.mxu0 0
    %617 = vmatprep.subr.bf16.mxu0 0
    %618 = vmatpush2.bf16.msra.mxu0 0
    %619 = vmatprep.subr.bf16.mxu0 0
    %620 = vmatpush2.bf16.msra.mxu0 0
    %621 = vmatprep.subr.bf16.mxu0 0
    %622 = vmatpush2.bf16.msra.mxu0 0
    %623 = vmatprep.subr.bf16.mxu0 0
    %624 = vmatpush2.bf16.msra.mxu0 0
    %625 = vmatprep.subr.bf16.mxu0 0
    %626 = vmatpush2.bf16.msra.mxu0 0
    %627 = vmatprep.subr.bf16.mxu0 0
    %628 = vmatpush2.bf16.msra.mxu0 0
    %629 = vmatprep.mubr.bf16.mxu0 0
    %630 = vmatmul.mubr.bf16.gmra.mxu0 %v592
    %v631 = vpop.f32.mrf.mxu0
    %v632 = vadd.f32 0.0, %v631
    %v633 = vpop.f32.mrf.mxu0
    %v634 = vpop.f32.mrf.mxu0
    %v635 = vpop.f32.mrf.mxu0
    %636 = vdwg.mxu0
    %638 = vrot.lane.b32.xlu0 %v412, 16
    %v639 = vpop.permute.xlu0 %638
    %642 = vrot.lane.b32.xlu0 %v522, 32
    %v643 = vpop.permute.xlu0 %642
    %646 = vrot.lane.b32.xlu0 %v632, 48
    %v647 = vpop.permute.xlu0 %646
    %v649 = vsel %vm196, %v301, %v639
    %v650 = vsel %vm34, %v649, %v643
    %vm651 = vcmask 392192
    %v652 = vsel %vm651, %v650, %v647
    %v653 = vpack.c.bf16 %v652, %v652
    %v654 = vld [vmem:[%s5] sm:$0xf]
    %v655 = vld [vmem:[%s5 + $0x4] sm:$0xf]
    %v656 = vld [vmem:[%s5 + $0x8] sm:$0xf]
    %v657 = vld [vmem:[%s5 + $0xc] sm:$0xf]
    %v658 = vld [vmem:[%s5 + $0x10] sm:$0xf]
    %v659 = vld [vmem:[%s5 + $0x14] sm:$0xf]
    %v660 = vld [vmem:[%s5 + $0x18] sm:$0xf]
    %v661 = vld [vmem:[%s5 + $0x1c] sm:$0xf]
    %v662 = vlaneseq
    %v663 = vshrl.u32 %v662, 7
    %v664 = vsub.s32 2, %v663
    %v665 = vrot.slane %v33, %v664
    %v674 = vunpack.c.l.b16 %v654
    %v675 = vunpack.c.l.b16 %v655
    %v676 = vunpack.c.l.b16 %v656
    %v677 = vunpack.c.l.b16 %v657
    %v678 = vunpack.c.l.b16 %v658
    %v679 = vunpack.c.l.b16 %v659
    %v680 = vunpack.c.l.b16 %v660
    %v681 = vunpack.c.l.b16 %v661
    %v682 = vpack.c.b16 %v675, %v674
    %v683 = vpack.c.b16 %v677, %v676
    %v684 = vpack.c.b16 %v679, %v678
    %v685 = vpack.c.b16 %v681, %v680
    %vm690 = vcmask 523264
    %v692 = vsel %vm690, %v653, 0
    %694 = vmatprep.subr.bf16.mxu0 0
    %695 = vmatpush1.bf16.msra.mxu0 0
    %696 = vmatprep.subr.bf16.mxu0 0
    %697 = vmatpush1.bf16.msra.mxu0 0
    %698 = vmatprep.subr.bf16.mxu0 0
    %699 = vmatpush1.bf16.msra.mxu0 0
    %700 = vmatprep.subr.bf16.mxu0 0
    %701 = vmatpush1.bf16.msra.mxu0 0
    %702 = vmatprep.subr.bf16.mxu0 0
    %703 = vmatpush1.bf16.msra.mxu0 %v685
    %704 = vmatprep.subr.bf16.mxu0 0
    %705 = vmatpush1.bf16.msra.mxu0 %v684
    %706 = vmatprep.subr.bf16.mxu0 0
    %707 = vmatpush1.bf16.msra.mxu0 %v683
    %708 = vmatprep.subr.bf16.mxu0 0
    %709 = vmatpush1.bf16.msra.mxu0 %v682
    %710 = vmatprep.subr.bf16.mxu0 0
    %711 = vmatpush2.bf16.msra.mxu0 0
    %712 = vmatprep.subr.bf16.mxu0 0
    %713 = vmatpush2.bf16.msra.mxu0 0
    %714 = vmatprep.subr.bf16.mxu0 0
    %715 = vmatpush2.bf16.msra.mxu0 0
    %716 = vmatprep.subr.bf16.mxu0 0
    %717 = vmatpush2.bf16.msra.mxu0 0
    %718 = vmatprep.subr.bf16.mxu0 0
    %719 = vmatpush2.bf16.msra.mxu0 0
    %720 = vmatprep.subr.bf16.mxu0 0
    %721 = vmatpush2.bf16.msra.mxu0 0
    %722 = vmatprep.subr.bf16.mxu0 0
    %723 = vmatpush2.bf16.msra.mxu0 0
    %724 = vmatprep.subr.bf16.mxu0 0
    %725 = vmatpush2.bf16.msra.mxu0 0
    %726 = vmatprep.mubr.bf16.mxu0 0
    %727 = vmatmul.mubr.bf16.gmra.mxu0 %v692
    %v728 = vpop.f32.mrf.mxu0
    %v729 = vadd.f32 %v665, %v728
    %v730 = vpop.f32.mrf.mxu0
    %v731 = vpop.f32.mrf.mxu0
    %v732 = vpop.f32.mrf.mxu0
    %733 = vdwg.mxu0
    %v734 = vadd.f32 %v729, %v31
    %v735 = vsel %vm34, %v734, 0.0
    %736 = vadd.xlane.f32.xlu0 %v735
    %v737 = vpop.xlane.xlu0 %736
    %v738 = vmul.f32 %v737, %v38
    %v739 = vsub.f32 %v734, %v738
    %v740 = vmul.f32 %v739, %v739
    %v741 = vsel %vm34, %v740, 0.0
    %742 = vadd.xlane.f32.xlu0 %v741
    %v743 = vpop.xlane.xlu0 %742
    %v744 = vmul.f32 %v743, %v38
    %v745 = vadd.f32 %v744, 1e-05
    %v746 = vrsqrt.pop %v745
    %v747 = vmul.f32 %v739, %v746
    %v748 = vlaneseq
    %v749 = vshrl.u32 %v748, 7
    %v750 = vsub.s32 3, %v749
    %v751 = vrot.slane %v33, %v750
    %v752 = vmul.f32 %v747, %v751
    %v753 = vlaneseq
    %v754 = vshrl.u32 %v753, 7
    %v755 = vsub.s32 4, %v754
    %v756 = vrot.slane %v33, %v755
    %v757 = vadd.f32 %v752, %v756
    %v758 = vpack.c.bf16 %v757, %v757
    %v759 = vld [vmem:[%s6] sm:$0xf]
    %v760 = vld [vmem:[%s6 + $0x4] sm:$0xf]
    %v761 = vld [vmem:[%s6 + $0x8] sm:$0xf]
    %v762 = vld [vmem:[%s6 + $0xc] sm:$0xf]
    %v763 = vlaneseq
    %v764 = vshrl.u32 %v763, 7
    %v765 = vsub.s32 5, %v764
    %v766 = vrot.slane %v33, %v765
    %v771 = vunpack.c.l.b16 %v759
    %v772 = vunpack.c.l.b16 %v760
    %v773 = vunpack.c.l.b16 %v761
    %v774 = vunpack.c.l.b16 %v762
    %v775 = vpack.c.b16 %v772, %v771
    %v776 = vpack.c.b16 %v774, %v773
    %v780 = vsel %vm34, %v758, 0
    %782 = vmatprep.subr.bf16.mxu0 0
    %783 = vmatpush1.bf16.msra.mxu0 0
    %784 = vmatprep.subr.bf16.mxu0 0
    %785 = vmatpush1.bf16.msra.mxu0 0
    %786 = vmatprep.subr.bf16.mxu0 0
    %787 = vmatpush1.bf16.msra.mxu0 0
    %788 = vmatprep.subr.bf16.mxu0 0
    %789 = vmatpush1.bf16.msra.mxu0 0
    %790 = vmatprep.subr.bf16.mxu0 0
    %791 = vmatpush1.bf16.msra.mxu0 0
    %792 = vmatprep.subr.bf16.mxu0 0
    %793 = vmatpush1.bf16.msra.mxu0 0
    %794 = vmatprep.subr.bf16.mxu0 0
    %795 = vmatpush1.bf16.msra.mxu0 %v776
    %796 = vmatprep.subr.bf16.mxu0 0
    %797 = vmatpush1.bf16.msra.mxu0 %v775
    %798 = vmatprep.subr.bf16.mxu0 0
    %799 = vmatpush2.bf16.msra.mxu0 0
    %800 = vmatprep.subr.bf16.mxu0 0
    %801 = vmatpush2.bf16.msra.mxu0 0
    %802 = vmatprep.subr.bf16.mxu0 0
    %803 = vmatpush2.bf16.msra.mxu0 0
    %804 = vmatprep.subr.bf16.mxu0 0
    %805 = vmatpush2.bf16.msra.mxu0 0
    %806 = vmatprep.subr.bf16.mxu0 0
    %807 = vmatpush2.bf16.msra.mxu0 0
    %808 = vmatprep.subr.bf16.mxu0 0
    %809 = vmatpush2.bf16.msra.mxu0 0
    %810 = vmatprep.subr.bf16.mxu0 0
    %811 = vmatpush2.bf16.msra.mxu0 0
    %812 = vmatprep.subr.bf16.mxu0 0
    %813 = vmatpush2.bf16.msra.mxu0 0
    %814 = vmatprep.mubr.bf16.mxu0 0
    %815 = vmatmul.mubr.bf16.gmra.mxu0 %v780
    %v816 = vpop.f32.mrf.mxu0
    %v817 = vadd.f32 %v766, %v816
    %v818 = vpop.f32.mrf.mxu0
    %v819 = vpop.f32.mrf.mxu0
    %v820 = vpop.f32.mrf.mxu0
    %821 = vdwg.mxu0
    %v822 = vmul.f32 %v817, %v817
    %v823 = vmul.f32 %v817, %v822
    %v824 = vmul.f32 %v823, 0.044715
    %v825 = vadd.f32 %v817, %v824
    %v826 = vmul.f32 %v825, 0.7978846
    %v827 = vtanh.pop %v826
    %v828 = vadd.f32 %v827, 1.0
    %v829 = vmul.f32 %v828, 0.5
    %v830 = vmul.f32 %v817, %v829
    %v831 = vpack.c.bf16 %v830, %v830
    %v832 = vld [vmem:[%s7] sm:$0xf]
    %v833 = vld [vmem:[%s7 + $0x4] sm:$0xf]
    %v834 = vld [vmem:[%s7 + $0x8] sm:$0xf]
    %v835 = vld [vmem:[%s7 + $0xc] sm:$0xf]
    %v836 = vld [vmem:[%s7 + $0x10] sm:$0xf]
    %v837 = vld [vmem:[%s7 + $0x14] sm:$0xf]
    %v838 = vld [vmem:[%s7 + $0x18] sm:$0xf]
    %v839 = vld [vmem:[%s7 + $0x1c] sm:$0xf]
    %v840 = vlaneseq
    %v841 = vshrl.u32 %v840, 7
    %v842 = vsub.s32 6, %v841
    %v843 = vrot.slane %v33, %v842
    %v852 = vunpack.c.l.b16 %v832
    %v853 = vunpack.c.l.b16 %v833
    %v854 = vunpack.c.l.b16 %v834
    %v855 = vunpack.c.l.b16 %v835
    %v856 = vunpack.c.l.b16 %v836
    %v857 = vunpack.c.l.b16 %v837
    %v858 = vunpack.c.l.b16 %v838
    %v859 = vunpack.c.l.b16 %v839
    %v860 = vpack.c.b16 %v853, %v852
    %v861 = vpack.c.b16 %v855, %v854
    %v862 = vpack.c.b16 %v857, %v856
    %v863 = vpack.c.b16 %v859, %v858
    %v869 = vsel %vm690, %v831, 0
    %871 = vmatprep.subr.bf16.mxu0 0
    %872 = vmatpush1.bf16.msra.mxu0 0
    %873 = vmatprep.subr.bf16.mxu0 0
    %874 = vmatpush1.bf16.msra.mxu0 0
    %875 = vmatprep.subr.bf16.mxu0 0
    %876 = vmatpush1.bf16.msra.mxu0 0
    %877 = vmatprep.subr.bf16.mxu0 0
    %878 = vmatpush1.bf16.msra.mxu0 0
    %879 = vmatprep.subr.bf16.mxu0 0
    %880 = vmatpush1.bf16.msra.mxu0 %v863
    %881 = vmatprep.subr.bf16.mxu0 0
    %882 = vmatpush1.bf16.msra.mxu0 %v862
    %883 = vmatprep.subr.bf16.mxu0 0
    %884 = vmatpush1.bf16.msra.mxu0 %v861
    %885 = vmatprep.subr.bf16.mxu0 0
    %886 = vmatpush1.bf16.msra.mxu0 %v860
    %887 = vmatprep.subr.bf16.mxu0 0
    %888 = vmatpush2.bf16.msra.mxu0 0
    %889 = vmatprep.subr.bf16.mxu0 0
    %890 = vmatpush2.bf16.msra.mxu0 0
    %891 = vmatprep.subr.bf16.mxu0 0
    %892 = vmatpush2.bf16.msra.mxu0 0
    %893 = vmatprep.subr.bf16.mxu0 0
    %894 = vmatpush2.bf16.msra.mxu0 0
    %895 = vmatprep.subr.bf16.mxu0 0
    %896 = vmatpush2.bf16.msra.mxu0 0
    %897 = vmatprep.subr.bf16.mxu0 0
    %898 = vmatpush2.bf16.msra.mxu0 0
    %899 = vmatprep.subr.bf16.mxu0 0
    %900 = vmatpush2.bf16.msra.mxu0 0
    %901 = vmatprep.subr.bf16.mxu0 0
    %902 = vmatpush2.bf16.msra.mxu0 0
    %903 = vmatprep.mubr.bf16.mxu0 0
    %904 = vmatmul.mubr.bf16.gmra.mxu0 %v869
    %v905 = vpop.f32.mrf.mxu0
    %v906 = vadd.f32 %v843, %v905
    %v907 = vpop.f32.mrf.mxu0
    %v908 = vpop.f32.mrf.mxu0
    %v909 = vpop.f32.mrf.mxu0
    %910 = vdwg.mxu0
    %v911 = vadd.f32 %v906, %v734
    %s912 = scalar_lea.vmem %s2, 8
    %v913 = vld [vmem:[%s912] sm:$0xff]
    %v914 = vsel %vm34, %v911, 0.0
    %915 = vadd.xlane.f32.xlu0 %v914
    %v916 = vpop.xlane.xlu0 %915
    %v917 = vmul.f32 %v916, %v38
    %v918 = vsub.f32 %v911, %v917
    %v919 = vmul.f32 %v918, %v918
    %v920 = vsel %vm34, %v919, 0.0
    %921 = vadd.xlane.f32.xlu0 %v920
    %v922 = vpop.xlane.xlu0 %921
    %v923 = vmul.f32 %v922, %v38
    %v924 = vadd.f32 %v923, 1e-05
    %v925 = vrsqrt.pop %v924
    %v926 = vmul.f32 %v918, %v925
    %v927 = vlaneseq
    %v928 = vshrl.u32 %v927, 7
    %v929 = vsub.s32 0, %v928
    %v930 = vrot.slane %v913, %v929
    %v931 = vmul.f32 %v926, %v930
    %v932 = vlaneseq
    %v933 = vshrl.u32 %v932, 7
    %v934 = vsub.s32 1, %v933
    %v935 = vrot.slane %v913, %v934
    %v936 = vadd.f32 %v931, %v935
    %v937 = vmul.f32 %v71, %v930
    %v938 = vadd.f32 %v937, %v935
    %v939 = vpack.c.bf16 %v936, %v936
    %s940 = scalar_lea.vmem %s3, 16
    %v941 = vld [vmem:[%s940] sm:$0xf]
    %v942 = vld [vmem:[%s940 + $0x4] sm:$0xf]
    %v943 = vld [vmem:[%s940 + $0x8] sm:$0xf]
    %v944 = vld [vmem:[%s940 + $0xc] sm:$0xf]
    %v949 = vunpack.c.l.b16 %v941
    %v950 = vunpack.c.l.b16 %v942
    %v951 = vunpack.c.l.b16 %v943
    %v952 = vunpack.c.l.b16 %v944
    %v953 = vpack.c.b16 %v950, %v949
    %v954 = vpack.c.b16 %v952, %v951
    %v958 = vsel %vm34, %v939, 0
    %960 = vmatprep.subr.bf16.mxu0 0
    %961 = vmatpush1.bf16.msra.mxu0 0
    %962 = vmatprep.subr.bf16.mxu0 0
    %963 = vmatpush1.bf16.msra.mxu0 0
    %964 = vmatprep.subr.bf16.mxu0 0
    %965 = vmatpush1.bf16.msra.mxu0 0
    %966 = vmatprep.subr.bf16.mxu0 0
    %967 = vmatpush1.bf16.msra.mxu0 0
    %968 = vmatprep.subr.bf16.mxu0 0
    %969 = vmatpush1.bf16.msra.mxu0 0
    %970 = vmatprep.subr.bf16.mxu0 0
    %971 = vmatpush1.bf16.msra.mxu0 0
    %972 = vmatprep.subr.bf16.mxu0 0
    %973 = vmatpush1.bf16.msra.mxu0 %v954
    %974 = vmatprep.subr.bf16.mxu0 0
    %975 = vmatpush1.bf16.msra.mxu0 %v953
    %976 = vmatprep.subr.bf16.mxu0 0
    %977 = vmatpush2.bf16.msra.mxu0 0
    %978 = vmatprep.subr.bf16.mxu0 0
    %979 = vmatpush2.bf16.msra.mxu0 0
    %980 = vmatprep.subr.bf16.mxu0 0
    %981 = vmatpush2.bf16.msra.mxu0 0
    %982 = vmatprep.subr.bf16.mxu0 0
    %983 = vmatpush2.bf16.msra.mxu0 0
    %984 = vmatprep.subr.bf16.mxu0 0
    %985 = vmatpush2.bf16.msra.mxu0 0
    %986 = vmatprep.subr.bf16.mxu0 0
    %987 = vmatpush2.bf16.msra.mxu0 0
    %988 = vmatprep.subr.bf16.mxu0 0
    %989 = vmatpush2.bf16.msra.mxu0 0
    %990 = vmatprep.subr.bf16.mxu0 0
    %991 = vmatpush2.bf16.msra.mxu0 0
    %992 = vmatprep.mubr.bf16.mxu0 0
    %993 = vmatmul.mubr.bf16.gmra.mxu0 %v958
    %v994 = vpop.f32.mrf.mxu0
    %v995 = vadd.f32 0.0, %v994
    %v996 = vpop.f32.mrf.mxu0
    %v997 = vpop.f32.mrf.mxu0
    %v998 = vpop.f32.mrf.mxu0
    %999 = vdwg.mxu0
    %v1000 = vpack.c.bf16 %v938, %v938
    %s1001 = scalar_lea.vmem %s4, 16
    %v1002 = vld [vmem:[%s1001] sm:$0xf]
    %v1003 = vld [vmem:[%s1001 + $0x4] sm:$0xf]
    %v1004 = vld [vmem:[%s1001 + $0x8] sm:$0xf]
    %v1005 = vld [vmem:[%s1001 + $0xc] sm:$0xf]
    %v1010 = vunpack.c.l.b16 %v1002
    %v1011 = vunpack.c.l.b16 %v1003
    %v1012 = vunpack.c.l.b16 %v1004
    %v1013 = vunpack.c.l.b16 %v1005
    %v1014 = vpack.c.b16 %v1011, %v1010
    %v1015 = vpack.c.b16 %v1013, %v1012
    %v1019 = vsel %vm34, %v1000, 0
    %1021 = vmatprep.subr.bf16.mxu0 0
    %1022 = vmatpush1.bf16.msra.mxu0 0
    %1023 = vmatprep.subr.bf16.mxu0 0
    %1024 = vmatpush1.bf16.msra.mxu0 0
    %1025 = vmatprep.subr.bf16.mxu0 0
    %1026 = vmatpush1.bf16.msra.mxu0 0
    %1027 = vmatprep.subr.bf16.mxu0 0
    %1028 = vmatpush1.bf16.msra.mxu0 0
    %1029 = vmatprep.subr.bf16.mxu0 0
    %1030 = vmatpush1.bf16.msra.mxu0 0
    %1031 = vmatprep.subr.bf16.mxu0 0
    %1032 = vmatpush1.bf16.msra.mxu0 0
    %1033 = vmatprep.subr.bf16.mxu0 0
    %1034 = vmatpush1.bf16.msra.mxu0 %v1015
    %1035 = vmatprep.subr.bf16.mxu0 0
    %1036 = vmatpush1.bf16.msra.mxu0 %v1014
    %1037 = vmatprep.subr.bf16.mxu0 0
    %1038 = vmatpush2.bf16.msra.mxu0 0
    %1039 = vmatprep.subr.bf16.mxu0 0
    %1040 = vmatpush2.bf16.msra.mxu0 0
    %1041 = vmatprep.subr.bf16.mxu0 0
    %1042 = vmatpush2.bf16.msra.mxu0 0
    %1043 = vmatprep.subr.bf16.mxu0 0
    %1044 = vmatpush2.bf16.msra.mxu0 0
    %1045 = vmatprep.subr.bf16.mxu0 0
    %1046 = vmatpush2.bf16.msra.mxu0 0
    %1047 = vmatprep.subr.bf16.mxu0 0
    %1048 = vmatpush2.bf16.msra.mxu0 0
    %1049 = vmatprep.subr.bf16.mxu0 0
    %1050 = vmatpush2.bf16.msra.mxu0 0
    %1051 = vmatprep.subr.bf16.mxu0 0
    %1052 = vmatpush2.bf16.msra.mxu0 0
    %1053 = vmatprep.mubr.bf16.mxu0 0
    %1054 = vmatmul.mubr.bf16.gmra.mxu0 %v1019
    %v1055 = vpop.f32.mrf.mxu0
    %v1056 = vadd.f32 0.0, %v1055
    %v1057 = vpop.f32.mrf.mxu0
    %v1058 = vpop.f32.mrf.mxu0
    %v1059 = vpop.f32.mrf.mxu0
    %1060 = vdwg.mxu0
    %v1061 = vpack.c.bf16 %v995, %v995
    %v1062 = vpack.c.bf16 %v1056, %v1056
    %v1064 = vsel %vm196, %v1061, 0
    %v1067 = vsel %vm196, %v1062, 0
    %1069 = vmatprep.subr.bf16.mxu0 0
    %1070 = vmatpush1.bf16.xpose.msra.mxu0 0
    %1071 = vmatprep.subr.bf16.mxu0 0
    %1072 = vmatpush1.bf16.xpose.msra.mxu0 0
    %1073 = vmatprep.subr.bf16.mxu0 0
    %1074 = vmatpush1.bf16.xpose.msra.mxu0 0
    %1075 = vmatprep.subr.bf16.mxu0 0
    %1076 = vmatpush1.bf16.xpose.msra.mxu0 0
    %1077 = vmatprep.subr.bf16.mxu0 0
    %1078 = vmatpush1.bf16.xpose.msra.mxu0 0
    %1079 = vmatprep.subr.bf16.mxu0 0
    %1080 = vmatpush1.bf16.xpose.msra.mxu0 0
    %1081 = vmatprep.subr.bf16.mxu0 0
    %1082 = vmatpush1.bf16.xpose.msra.mxu0 0
    %1083 = vmatprep.subr.bf16.mxu0 0
    %1084 = vmatpush1.bf16.xpose.msra.mxu0 %v1067
    %1085 = vmatprep.subr.bf16.mxu0 0
    %1086 = vmatpush2.bf16.xpose.msra.mxu0 0
    %1087 = vmatprep.subr.bf16.mxu0 0
    %1088 = vmatpush2.bf16.xpose.msra.mxu0 0
    %1089 = vmatprep.subr.bf16.mxu0 0
    %1090 = vmatpush2.bf16.xpose.msra.mxu0 0
    %1091 = vmatprep.subr.bf16.mxu0 0
    %1092 = vmatpush2.bf16.xpose.msra.mxu0 0
    %1093 = vmatprep.subr.bf16.mxu0 0
    %1094 = vmatpush2.bf16.xpose.msra.mxu0 0
    %1095 = vmatprep.subr.bf16.mxu0 0
    %1096 = vmatpush2.bf16.xpose.msra.mxu0 0
    %1097 = vmatprep.subr.bf16.mxu0 0
    %1098 = vmatpush2.bf16.xpose.msra.mxu0 0
    %1099 = vmatprep.subr.bf16.mxu0 0
    %1100 = vmatpush2.bf16.xpose.msra.mxu0 0
    %1101 = vmatprep.mubr.bf16.mxu0 0
    %1102 = vmatmul.mubr.bf16.gmra.mxu0 %v1064
    %v1103 = vpop.f32.mrf.mxu0
    %v1104 = vadd.f32 0.0, %v1103
    %v1105 = vpop.f32.mrf.mxu0
    %v1106 = vpop.f32.mrf.mxu0
    %v1107 = vpop.f32.mrf.mxu0
    %1108 = vdwg.mxu0
    %v1109 = vsel %vm243, %v1104, -inf
    %1110 = vmax.xlane.f32.xlu0 %v1109
    %v1111 = vpop.xlane.xlu0 %1110
    %v1112 = vsub.f32 %v1104, %v1111
    %v1113 = vmul.f32 %v1112, 1.442695
    %v1114 = vpow.pop %v1113
    %v1115 = vsel %vm243, %v1114, 0.0
    %1116 = vadd.xlane.f32.xlu0 %v1115
    %v1117 = vpop.xlane.xlu0 %1116
    %v1118 = vrcp.pop %v1117
    %v1119 = vmul.f32 %v1114, %v1118
    %v1120 = vpack.c.bf16 %v1119, %v1119
    %1122 = vrot.lane.b32.xlu0 %v1062, 64
    %v1123 = vpop.permute.xlu0 %1122
    %v1125 = vsel %vm243, %v1120, 0
    %v1128 = vsel %vm262, %v1123, 0
    %1130 = vmatprep.subr.bf16.mxu0 0
    %1131 = vmatpush1.bf16.msra.mxu0 0
    %1132 = vmatprep.subr.bf16.mxu0 0
    %1133 = vmatpush1.bf16.msra.mxu0 0
    %1134 = vmatprep.subr.bf16.mxu0 0
    %1135 = vmatpush1.bf16.msra.mxu0 0
    %1136 = vmatprep.subr.bf16.mxu0 0
    %1137 = vmatpush1.bf16.msra.mxu0 0
    %1138 = vmatprep.subr.bf16.mxu0 0
    %1139 = vmatpush1.bf16.msra.mxu0 0
    %1140 = vmatprep.subr.bf16.mxu0 0
    %1141 = vmatpush1.bf16.msra.mxu0 0
    %1142 = vmatprep.subr.bf16.mxu0 0
    %1143 = vmatpush1.bf16.msra.mxu0 0
    %1144 = vmatprep.subr.bf16.mxu0 0
    %1145 = vmatpush1.bf16.msra.mxu0 %v1128
    %1146 = vmatprep.subr.bf16.mxu0 0
    %1147 = vmatpush2.bf16.msra.mxu0 0
    %1148 = vmatprep.subr.bf16.mxu0 0
    %1149 = vmatpush2.bf16.msra.mxu0 0
    %1150 = vmatprep.subr.bf16.mxu0 0
    %1151 = vmatpush2.bf16.msra.mxu0 0
    %1152 = vmatprep.subr.bf16.mxu0 0
    %1153 = vmatpush2.bf16.msra.mxu0 0
    %1154 = vmatprep.subr.bf16.mxu0 0
    %1155 = vmatpush2.bf16.msra.mxu0 0
    %1156 = vmatprep.subr.bf16.mxu0 0
    %1157 = vmatpush2.bf16.msra.mxu0 0
    %1158 = vmatprep.subr.bf16.mxu0 0
    %1159 = vmatpush2.bf16.msra.mxu0 0
    %1160 = vmatprep.subr.bf16.mxu0 0
    %1161 = vmatpush2.bf16.msra.mxu0 0
    %1162 = vmatprep.mubr.bf16.mxu0 0
    %1163 = vmatmul.mubr.bf16.gmra.mxu0 %v1125
    %v1164 = vpop.f32.mrf.mxu0
    %v1165 = vadd.f32 0.0, %v1164
    %v1166 = vpop.f32.mrf.mxu0
    %v1167 = vpop.f32.mrf.mxu0
    %v1168 = vpop.f32.mrf.mxu0
    %1169 = vdwg.mxu0
    %1171 = vrot.lane.b32.xlu0 %v1061, 112
    %v1172 = vpop.permute.xlu0 %1171
    %1173 = vrot.lane.b32.xlu0 %v1062, 112
    %v1174 = vpop.permute.xlu0 %1173
    %v1176 = vsel %vm196, %v1172, 0
    %v1179 = vsel %vm196, %v1174, 0
    %1181 = vmatprep.subr.bf16.mxu0 0
    %1182 = vmatpush1.bf16.xpose.msra.mxu0 0
    %1183 = vmatprep.subr.bf16.mxu0 0
    %1184 = vmatpush1.bf16.xpose.msra.mxu0 0
    %1185 = vmatprep.subr.bf16.mxu0 0
    %1186 = vmatpush1.bf16.xpose.msra.mxu0 0
    %1187 = vmatprep.subr.bf16.mxu0 0
    %1188 = vmatpush1.bf16.xpose.msra.mxu0 0
    %1189 = vmatprep.subr.bf16.mxu0 0
    %1190 = vmatpush1.bf16.xpose.msra.mxu0 0
    %1191 = vmatprep.subr.bf16.mxu0 0
    %1192 = vmatpush1.bf16.xpose.msra.mxu0 0
    %1193 = vmatprep.subr.bf16.mxu0 0
    %1194 = vmatpush1.bf16.xpose.msra.mxu0 0
    %1195 = vmatprep.subr.bf16.mxu0 0
    %1196 = vmatpush1.bf16.xpose.msra.mxu0 %v1179
    %1197 = vmatprep.subr.bf16.mxu0 0
    %1198 = vmatpush2.bf16.xpose.msra.mxu0 0
    %1199 = vmatprep.subr.bf16.mxu0 0
    %1200 = vmatpush2.bf16.xpose.msra.mxu0 0
    %1201 = vmatprep.subr.bf16.mxu0 0
    %1202 = vmatpush2.bf16.xpose.msra.mxu0 0
    %1203 = vmatprep.subr.bf16.mxu0 0
    %1204 = vmatpush2.bf16.xpose.msra.mxu0 0
    %1205 = vmatprep.subr.bf16.mxu0 0
    %1206 = vmatpush2.bf16.xpose.msra.mxu0 0
    %1207 = vmatprep.subr.bf16.mxu0 0
    %1208 = vmatpush2.bf16.xpose.msra.mxu0 0
    %1209 = vmatprep.subr.bf16.mxu0 0
    %1210 = vmatpush2.bf16.xpose.msra.mxu0 0
    %1211 = vmatprep.subr.bf16.mxu0 0
    %1212 = vmatpush2.bf16.xpose.msra.mxu0 0
    %1213 = vmatprep.mubr.bf16.mxu0 0
    %1214 = vmatmul.mubr.bf16.gmra.mxu0 %v1176
    %v1215 = vpop.f32.mrf.mxu0
    %v1216 = vadd.f32 0.0, %v1215
    %v1217 = vpop.f32.mrf.mxu0
    %v1218 = vpop.f32.mrf.mxu0
    %v1219 = vpop.f32.mrf.mxu0
    %1220 = vdwg.mxu0
    %v1221 = vsel %vm243, %v1216, -inf
    %1222 = vmax.xlane.f32.xlu0 %v1221
    %v1223 = vpop.xlane.xlu0 %1222
    %v1224 = vsub.f32 %v1216, %v1223
    %v1225 = vmul.f32 %v1224, 1.442695
    %v1226 = vpow.pop %v1225
    %v1227 = vsel %vm243, %v1226, 0.0
    %1228 = vadd.xlane.f32.xlu0 %v1227
    %v1229 = vpop.xlane.xlu0 %1228
    %v1230 = vrcp.pop %v1229
    %v1231 = vmul.f32 %v1226, %v1230
    %v1232 = vpack.c.bf16 %v1231, %v1231
    %1233 = vrot.lane.b32.xlu0 %v1062, 48
    %v1234 = vpop.permute.xlu0 %1233
    %v1236 = vsel %vm243, %v1232, 0
    %v1239 = vsel %vm262, %v1234, 0
    %1241 = vmatprep.subr.bf16.mxu0 0
    %1242 = vmatpush1.bf16.msra.mxu0 0
    %1243 = vmatprep.subr.bf16.mxu0 0
    %1244 = vmatpush1.bf16.msra.mxu0 0
    %1245 = vmatprep.subr.bf16.mxu0 0
    %1246 = vmatpush1.bf16.msra.mxu0 0
    %1247 = vmatprep.subr.bf16.mxu0 0
    %1248 = vmatpush1.bf16.msra.mxu0 0
    %1249 = vmatprep.subr.bf16.mxu0 0
    %1250 = vmatpush1.bf16.msra.mxu0 0
    %1251 = vmatprep.subr.bf16.mxu0 0
    %1252 = vmatpush1.bf16.msra.mxu0 0
    %1253 = vmatprep.subr.bf16.mxu0 0
    %1254 = vmatpush1.bf16.msra.mxu0 0
    %1255 = vmatprep.subr.bf16.mxu0 0
    %1256 = vmatpush1.bf16.msra.mxu0 %v1239
    %1257 = vmatprep.subr.bf16.mxu0 0
    %1258 = vmatpush2.bf16.msra.mxu0 0
    %1259 = vmatprep.subr.bf16.mxu0 0
    %1260 = vmatpush2.bf16.msra.mxu0 0
    %1261 = vmatprep.subr.bf16.mxu0 0
    %1262 = vmatpush2.bf16.msra.mxu0 0
    %1263 = vmatprep.subr.bf16.mxu0 0
    %1264 = vmatpush2.bf16.msra.mxu0 0
    %1265 = vmatprep.subr.bf16.mxu0 0
    %1266 = vmatpush2.bf16.msra.mxu0 0
    %1267 = vmatprep.subr.bf16.mxu0 0
    %1268 = vmatpush2.bf16.msra.mxu0 0
    %1269 = vmatprep.subr.bf16.mxu0 0
    %1270 = vmatpush2.bf16.msra.mxu0 0
    %1271 = vmatprep.subr.bf16.mxu0 0
    %1272 = vmatpush2.bf16.msra.mxu0 0
    %1273 = vmatprep.mubr.bf16.mxu0 0
    %1274 = vmatmul.mubr.bf16.gmra.mxu0 %v1236
    %v1275 = vpop.f32.mrf.mxu0
    %v1276 = vadd.f32 0.0, %v1275
    %v1277 = vpop.f32.mrf.mxu0
    %v1278 = vpop.f32.mrf.mxu0
    %v1279 = vpop.f32.mrf.mxu0
    %1280 = vdwg.mxu0
    %1281 = vrot.lane.b32.xlu0 %v1061, 96
    %v1282 = vpop.permute.xlu0 %1281
    %1283 = vrot.lane.b32.xlu0 %v1062, 96
    %v1284 = vpop.permute.xlu0 %1283
    %v1286 = vsel %vm196, %v1282, 0
    %v1289 = vsel %vm196, %v1284, 0
    %1291 = vmatprep.subr.bf16.mxu0 0
    %1292 = vmatpush1.bf16.xpose.msra.mxu0 0
    %1293 = vmatprep.subr.bf16.mxu0 0
    %1294 = vmatpush1.bf16.xpose.msra.mxu0 0
    %1295 = vmatprep.subr.bf16.mxu0 0
    %1296 = vmatpush1.bf16.xpose.msra.mxu0 0
    %1297 = vmatprep.subr.bf16.mxu0 0
    %1298 = vmatpush1.bf16.xpose.msra.mxu0 0
    %1299 = vmatprep.subr.bf16.mxu0 0
    %1300 = vmatpush1.bf16.xpose.msra.mxu0 0
    %1301 = vmatprep.subr.bf16.mxu0 0
    %1302 = vmatpush1.bf16.xpose.msra.mxu0 0
    %1303 = vmatprep.subr.bf16.mxu0 0
    %1304 = vmatpush1.bf16.xpose.msra.mxu0 0
    %1305 = vmatprep.subr.bf16.mxu0 0
    %1306 = vmatpush1.bf16.xpose.msra.mxu0 %v1289
    %1307 = vmatprep.subr.bf16.mxu0 0
    %1308 = vmatpush2.bf16.xpose.msra.mxu0 0
    %1309 = vmatprep.subr.bf16.mxu0 0
    %1310 = vmatpush2.bf16.xpose.msra.mxu0 0
    %1311 = vmatprep.subr.bf16.mxu0 0
    %1312 = vmatpush2.bf16.xpose.msra.mxu0 0
    %1313 = vmatprep.subr.bf16.mxu0 0
    %1314 = vmatpush2.bf16.xpose.msra.mxu0 0
    %1315 = vmatprep.subr.bf16.mxu0 0
    %1316 = vmatpush2.bf16.xpose.msra.mxu0 0
    %1317 = vmatprep.subr.bf16.mxu0 0
    %1318 = vmatpush2.bf16.xpose.msra.mxu0 0
    %1319 = vmatprep.subr.bf16.mxu0 0
    %1320 = vmatpush2.bf16.xpose.msra.mxu0 0
    %1321 = vmatprep.subr.bf16.mxu0 0
    %1322 = vmatpush2.bf16.xpose.msra.mxu0 0
    %1323 = vmatprep.mubr.bf16.mxu0 0
    %1324 = vmatmul.mubr.bf16.gmra.mxu0 %v1286
    %v1325 = vpop.f32.mrf.mxu0
    %v1326 = vadd.f32 0.0, %v1325
    %v1327 = vpop.f32.mrf.mxu0
    %v1328 = vpop.f32.mrf.mxu0
    %v1329 = vpop.f32.mrf.mxu0
    %1330 = vdwg.mxu0
    %v1331 = vsel %vm243, %v1326, -inf
    %1332 = vmax.xlane.f32.xlu0 %v1331
    %v1333 = vpop.xlane.xlu0 %1332
    %v1334 = vsub.f32 %v1326, %v1333
    %v1335 = vmul.f32 %v1334, 1.442695
    %v1336 = vpow.pop %v1335
    %v1337 = vsel %vm243, %v1336, 0.0
    %1338 = vadd.xlane.f32.xlu0 %v1337
    %v1339 = vpop.xlane.xlu0 %1338
    %v1340 = vrcp.pop %v1339
    %v1341 = vmul.f32 %v1336, %v1340
    %v1342 = vpack.c.bf16 %v1341, %v1341
    %1343 = vrot.lane.b32.xlu0 %v1062, 32
    %v1344 = vpop.permute.xlu0 %1343
    %v1346 = vsel %vm243, %v1342, 0
    %v1349 = vsel %vm262, %v1344, 0
    %1351 = vmatprep.subr.bf16.mxu0 0
    %1352 = vmatpush1.bf16.msra.mxu0 0
    %1353 = vmatprep.subr.bf16.mxu0 0
    %1354 = vmatpush1.bf16.msra.mxu0 0
    %1355 = vmatprep.subr.bf16.mxu0 0
    %1356 = vmatpush1.bf16.msra.mxu0 0
    %1357 = vmatprep.subr.bf16.mxu0 0
    %1358 = vmatpush1.bf16.msra.mxu0 0
    %1359 = vmatprep.subr.bf16.mxu0 0
    %1360 = vmatpush1.bf16.msra.mxu0 0
    %1361 = vmatprep.subr.bf16.mxu0 0
    %1362 = vmatpush1.bf16.msra.mxu0 0
    %1363 = vmatprep.subr.bf16.mxu0 0
    %1364 = vmatpush1.bf16.msra.mxu0 0
    %1365 = vmatprep.subr.bf16.mxu0 0
    %1366 = vmatpush1.bf16.msra.mxu0 %v1349
    %1367 = vmatprep.subr.bf16.mxu0 0
    %1368 = vmatpush2.bf16.msra.mxu0 0
    %1369 = vmatprep.subr.bf16.mxu0 0
    %1370 = vmatpush2.bf16.msra.mxu0 0
    %1371 = vmatprep.subr.bf16.mxu0 0
    %1372 = vmatpush2.bf16.msra.mxu0 0
    %1373 = vmatprep.subr.bf16.mxu0 0
    %1374 = vmatpush2.bf16.msra.mxu0 0
    %1375 = vmatprep.subr.bf16.mxu0 0
    %1376 = vmatpush2.bf16.msra.mxu0 0
    %1377 = vmatprep.subr.bf16.mxu0 0
    %1378 = vmatpush2.bf16.msra.mxu0 0
    %1379 = vmatprep.subr.bf16.mxu0 0
    %1380 = vmatpush2.bf16.msra.mxu0 0
    %1381 = vmatprep.subr.bf16.mxu0 0
    %1382 = vmatpush2.bf16.msra.mxu0 0
    %1383 = vmatprep.mubr.bf16.mxu0 0
    %1384 = vmatmul.mubr.bf16.gmra.mxu0 %v1346
    %v1385 = vpop.f32.mrf.mxu0
    %v1386 = vadd.f32 0.0, %v1385
    %v1387 = vpop.f32.mrf.mxu0
    %v1388 = vpop.f32.mrf.mxu0
    %v1389 = vpop.f32.mrf.mxu0
    %1390 = vdwg.mxu0
    %1391 = vrot.lane.b32.xlu0 %v1061, 80
    %v1392 = vpop.permute.xlu0 %1391
    %1393 = vrot.lane.b32.xlu0 %v1062, 80
    %v1394 = vpop.permute.xlu0 %1393
    %v1396 = vsel %vm196, %v1392, 0
    %v1399 = vsel %vm196, %v1394, 0
    %1401 = vmatprep.subr.bf16.mxu0 0
    %1402 = vmatpush1.bf16.xpose.msra.mxu0 0
    %1403 = vmatprep.subr.bf16.mxu0 0
    %1404 = vmatpush1.bf16.xpose.msra.mxu0 0
    %1405 = vmatprep.subr.bf16.mxu0 0
    %1406 = vmatpush1.bf16.xpose.msra.mxu0 0
    %1407 = vmatprep.subr.bf16.mxu0 0
    %1408 = vmatpush1.bf16.xpose.msra.mxu0 0
    %1409 = vmatprep.subr.bf16.mxu0 0
    %1410 = vmatpush1.bf16.xpose.msra.mxu0 0
    %1411 = vmatprep.subr.bf16.mxu0 0
    %1412 = vmatpush1.bf16.xpose.msra.mxu0 0
    %1413 = vmatprep.subr.bf16.mxu0 0
    %1414 = vmatpush1.bf16.xpose.msra.mxu0 0
    %1415 = vmatprep.subr.bf16.mxu0 0
    %1416 = vmatpush1.bf16.xpose.msra.mxu0 %v1399
    %1417 = vmatprep.subr.bf16.mxu0 0
    %1418 = vmatpush2.bf16.xpose.msra.mxu0 0
    %1419 = vmatprep.subr.bf16.mxu0 0
    %1420 = vmatpush2.bf16.xpose.msra.mxu0 0
    %1421 = vmatprep.subr.bf16.mxu0 0
    %1422 = vmatpush2.bf16.xpose.msra.mxu0 0
    %1423 = vmatprep.subr.bf16.mxu0 0
    %1424 = vmatpush2.bf16.xpose.msra.mxu0 0
    %1425 = vmatprep.subr.bf16.mxu0 0
    %1426 = vmatpush2.bf16.xpose.msra.mxu0 0
    %1427 = vmatprep.subr.bf16.mxu0 0
    %1428 = vmatpush2.bf16.xpose.msra.mxu0 0
    %1429 = vmatprep.subr.bf16.mxu0 0
    %1430 = vmatpush2.bf16.xpose.msra.mxu0 0
    %1431 = vmatprep.subr.bf16.mxu0 0
    %1432 = vmatpush2.bf16.xpose.msra.mxu0 0
    %1433 = vmatprep.mubr.bf16.mxu0 0
    %1434 = vmatmul.mubr.bf16.gmra.mxu0 %v1396
    %v1435 = vpop.f32.mrf.mxu0
    %v1436 = vadd.f32 0.0, %v1435
    %v1437 = vpop.f32.mrf.mxu0
    %v1438 = vpop.f32.mrf.mxu0
    %v1439 = vpop.f32.mrf.mxu0
    %1440 = vdwg.mxu0
    %v1441 = vsel %vm243, %v1436, -inf
    %1442 = vmax.xlane.f32.xlu0 %v1441
    %v1443 = vpop.xlane.xlu0 %1442
    %v1444 = vsub.f32 %v1436, %v1443
    %v1445 = vmul.f32 %v1444, 1.442695
    %v1446 = vpow.pop %v1445
    %v1447 = vsel %vm243, %v1446, 0.0
    %1448 = vadd.xlane.f32.xlu0 %v1447
    %v1449 = vpop.xlane.xlu0 %1448
    %v1450 = vrcp.pop %v1449
    %v1451 = vmul.f32 %v1446, %v1450
    %v1452 = vpack.c.bf16 %v1451, %v1451
    %1453 = vrot.lane.b32.xlu0 %v1062, 16
    %v1454 = vpop.permute.xlu0 %1453
    %v1456 = vsel %vm243, %v1452, 0
    %v1459 = vsel %vm262, %v1454, 0
    %1461 = vmatprep.subr.bf16.mxu0 0
    %1462 = vmatpush1.bf16.msra.mxu0 0
    %1463 = vmatprep.subr.bf16.mxu0 0
    %1464 = vmatpush1.bf16.msra.mxu0 0
    %1465 = vmatprep.subr.bf16.mxu0 0
    %1466 = vmatpush1.bf16.msra.mxu0 0
    %1467 = vmatprep.subr.bf16.mxu0 0
    %1468 = vmatpush1.bf16.msra.mxu0 0
    %1469 = vmatprep.subr.bf16.mxu0 0
    %1470 = vmatpush1.bf16.msra.mxu0 0
    %1471 = vmatprep.subr.bf16.mxu0 0
    %1472 = vmatpush1.bf16.msra.mxu0 0
    %1473 = vmatprep.subr.bf16.mxu0 0
    %1474 = vmatpush1.bf16.msra.mxu0 0
    %1475 = vmatprep.subr.bf16.mxu0 0
    %1476 = vmatpush1.bf16.msra.mxu0 %v1459
    %1477 = vmatprep.subr.bf16.mxu0 0
    %1478 = vmatpush2.bf16.msra.mxu0 0
    %1479 = vmatprep.subr.bf16.mxu0 0
    %1480 = vmatpush2.bf16.msra.mxu0 0
    %1481 = vmatprep.subr.bf16.mxu0 0
    %1482 = vmatpush2.bf16.msra.mxu0 0
    %1483 = vmatprep.subr.bf16.mxu0 0
    %1484 = vmatpush2.bf16.msra.mxu0 0
    %1485 = vmatprep.subr.bf16.mxu0 0
    %1486 = vmatpush2.bf16.msra.mxu0 0
    %1487 = vmatprep.subr.bf16.mxu0 0
    %1488 = vmatpush2.bf16.msra.mxu0 0
    %1489 = vmatprep.subr.bf16.mxu0 0
    %1490 = vmatpush2.bf16.msra.mxu0 0
    %1491 = vmatprep.subr.bf16.mxu0 0
    %1492 = vmatpush2.bf16.msra.mxu0 0
    %1493 = vmatprep.mubr.bf16.mxu0 0
    %1494 = vmatmul.mubr.bf16.gmra.mxu0 %v1456
    %v1495 = vpop.f32.mrf.mxu0
    %v1496 = vadd.f32 0.0, %v1495
    %v1497 = vpop.f32.mrf.mxu0
    %v1498 = vpop.f32.mrf.mxu0
    %v1499 = vpop.f32.mrf.mxu0
    %1500 = vdwg.mxu0
    %1502 = vrot.lane.b32.xlu0 %v1276, 16
    %v1503 = vpop.permute.xlu0 %1502
    %1506 = vrot.lane.b32.xlu0 %v1386, 32
    %v1507 = vpop.permute.xlu0 %1506
    %1510 = vrot.lane.b32.xlu0 %v1496, 48
    %v1511 = vpop.permute.xlu0 %1510
    %v1513 = vsel %vm196, %v1165, %v1503
    %v1514 = vsel %vm34, %v1513, %v1507
    %v1515 = vsel %vm651, %v1514, %v1511
    %v1516 = vpack.c.bf16 %v1515, %v1515
    %s1517 = scalar_lea.vmem %s5, 32
    %v1518 = vld [vmem:[%s1517] sm:$0xf]
    %v1519 = vld [vmem:[%s1517 + $0x4] sm:$0xf]
    %v1520 = vld [vmem:[%s1517 + $0x8] sm:$0xf]
    %v1521 = vld [vmem:[%s1517 + $0xc] sm:$0xf]
    %v1522 = vld [vmem:[%s1517 + $0x10] sm:$0xf]
    %v1523 = vld [vmem:[%s1517 + $0x14] sm:$0xf]
    %v1524 = vld [vmem:[%s1517 + $0x18] sm:$0xf]
    %v1525 = vld [vmem:[%s1517 + $0x1c] sm:$0xf]
    %v1526 = vlaneseq
    %v1527 = vshrl.u32 %v1526, 7
    %v1528 = vsub.s32 2, %v1527
    %v1529 = vrot.slane %v913, %v1528
    %v1538 = vunpack.c.l.b16 %v1518
    %v1539 = vunpack.c.l.b16 %v1519
    %v1540 = vunpack.c.l.b16 %v1520
    %v1541 = vunpack.c.l.b16 %v1521
    %v1542 = vunpack.c.l.b16 %v1522
    %v1543 = vunpack.c.l.b16 %v1523
    %v1544 = vunpack.c.l.b16 %v1524
    %v1545 = vunpack.c.l.b16 %v1525
    %v1546 = vpack.c.b16 %v1539, %v1538
    %v1547 = vpack.c.b16 %v1541, %v1540
    %v1548 = vpack.c.b16 %v1543, %v1542
    %v1549 = vpack.c.b16 %v1545, %v1544
    %v1555 = vsel %vm690, %v1516, 0
    %1557 = vmatprep.subr.bf16.mxu0 0
    %1558 = vmatpush1.bf16.msra.mxu0 0
    %1559 = vmatprep.subr.bf16.mxu0 0
    %1560 = vmatpush1.bf16.msra.mxu0 0
    %1561 = vmatprep.subr.bf16.mxu0 0
    %1562 = vmatpush1.bf16.msra.mxu0 0
    %1563 = vmatprep.subr.bf16.mxu0 0
    %1564 = vmatpush1.bf16.msra.mxu0 0
    %1565 = vmatprep.subr.bf16.mxu0 0
    %1566 = vmatpush1.bf16.msra.mxu0 %v1549
    %1567 = vmatprep.subr.bf16.mxu0 0
    %1568 = vmatpush1.bf16.msra.mxu0 %v1548
    %1569 = vmatprep.subr.bf16.mxu0 0
    %1570 = vmatpush1.bf16.msra.mxu0 %v1547
    %1571 = vmatprep.subr.bf16.mxu0 0
    %1572 = vmatpush1.bf16.msra.mxu0 %v1546
    %1573 = vmatprep.subr.bf16.mxu0 0
    %1574 = vmatpush2.bf16.msra.mxu0 0
    %1575 = vmatprep.subr.bf16.mxu0 0
    %1576 = vmatpush2.bf16.msra.mxu0 0
    %1577 = vmatprep.subr.bf16.mxu0 0
    %1578 = vmatpush2.bf16.msra.mxu0 0
    %1579 = vmatprep.subr.bf16.mxu0 0
    %1580 = vmatpush2.bf16.msra.mxu0 0
    %1581 = vmatprep.subr.bf16.mxu0 0
    %1582 = vmatpush2.bf16.msra.mxu0 0
    %1583 = vmatprep.subr.bf16.mxu0 0
    %1584 = vmatpush2.bf16.msra.mxu0 0
    %1585 = vmatprep.subr.bf16.mxu0 0
    %1586 = vmatpush2.bf16.msra.mxu0 0
    %1587 = vmatprep.subr.bf16.mxu0 0
    %1588 = vmatpush2.bf16.msra.mxu0 0
    %1589 = vmatprep.mubr.bf16.mxu0 0
    %1590 = vmatmul.mubr.bf16.gmra.mxu0 %v1555
    %v1591 = vpop.f32.mrf.mxu0
    %v1592 = vadd.f32 %v1529, %v1591
    %v1593 = vpop.f32.mrf.mxu0
    %v1594 = vpop.f32.mrf.mxu0
    %v1595 = vpop.f32.mrf.mxu0
    %1596 = vdwg.mxu0
    %v1597 = vadd.f32 %v1592, %v911
    %v1598 = vsel %vm34, %v1597, 0.0
    %1599 = vadd.xlane.f32.xlu0 %v1598
    %v1600 = vpop.xlane.xlu0 %1599
    %v1601 = vmul.f32 %v1600, %v38
    %v1602 = vsub.f32 %v1597, %v1601
    %v1603 = vmul.f32 %v1602, %v1602
    %v1604 = vsel %vm34, %v1603, 0.0
    %1605 = vadd.xlane.f32.xlu0 %v1604
    %v1606 = vpop.xlane.xlu0 %1605
    %v1607 = vmul.f32 %v1606, %v38
    %v1608 = vadd.f32 %v1607, 1e-05
    %v1609 = vrsqrt.pop %v1608
    %v1610 = vmul.f32 %v1602, %v1609
    %v1611 = vlaneseq
    %v1612 = vshrl.u32 %v1611, 7
    %v1613 = vsub.s32 3, %v1612
    %v1614 = vrot.slane %v913, %v1613
    %v1615 = vmul.f32 %v1610, %v1614
    %v1616 = vlaneseq
    %v1617 = vshrl.u32 %v1616, 7
    %v1618 = vsub.s32 4, %v1617
    %v1619 = vrot.slane %v913, %v1618
    %v1620 = vadd.f32 %v1615, %v1619
    %v1621 = vpack.c.bf16 %v1620, %v1620
    %s1622 = scalar_lea.vmem %s6, 16
    %v1623 = vld [vmem:[%s1622] sm:$0xf]
    %v1624 = vld [vmem:[%s1622 + $0x4] sm:$0xf]
    %v1625 = vld [vmem:[%s1622 + $0x8] sm:$0xf]
    %v1626 = vld [vmem:[%s1622 + $0xc] sm:$0xf]
    %v1627 = vlaneseq
    %v1628 = vshrl.u32 %v1627, 7
    %v1629 = vsub.s32 5, %v1628
    %v1630 = vrot.slane %v913, %v1629
    %v1635 = vunpack.c.l.b16 %v1623
    %v1636 = vunpack.c.l.b16 %v1624
    %v1637 = vunpack.c.l.b16 %v1625
    %v1638 = vunpack.c.l.b16 %v1626
    %v1639 = vpack.c.b16 %v1636, %v1635
    %v1640 = vpack.c.b16 %v1638, %v1637
    %v1644 = vsel %vm34, %v1621, 0
    %1646 = vmatprep.subr.bf16.mxu0 0
    %1647 = vmatpush1.bf16.msra.mxu0 0
    %1648 = vmatprep.subr.bf16.mxu0 0
    %1649 = vmatpush1.bf16.msra.mxu0 0
    %1650 = vmatprep.subr.bf16.mxu0 0
    %1651 = vmatpush1.bf16.msra.mxu0 0
    %1652 = vmatprep.subr.bf16.mxu0 0
    %1653 = vmatpush1.bf16.msra.mxu0 0
    %1654 = vmatprep.subr.bf16.mxu0 0
    %1655 = vmatpush1.bf16.msra.mxu0 0
    %1656 = vmatprep.subr.bf16.mxu0 0
    %1657 = vmatpush1.bf16.msra.mxu0 0
    %1658 = vmatprep.subr.bf16.mxu0 0
    %1659 = vmatpush1.bf16.msra.mxu0 %v1640
    %1660 = vmatprep.subr.bf16.mxu0 0
    %1661 = vmatpush1.bf16.msra.mxu0 %v1639
    %1662 = vmatprep.subr.bf16.mxu0 0
    %1663 = vmatpush2.bf16.msra.mxu0 0
    %1664 = vmatprep.subr.bf16.mxu0 0
    %1665 = vmatpush2.bf16.msra.mxu0 0
    %1666 = vmatprep.subr.bf16.mxu0 0
    %1667 = vmatpush2.bf16.msra.mxu0 0
    %1668 = vmatprep.subr.bf16.mxu0 0
    %1669 = vmatpush2.bf16.msra.mxu0 0
    %1670 = vmatprep.subr.bf16.mxu0 0
    %1671 = vmatpush2.bf16.msra.mxu0 0
    %1672 = vmatprep.subr.bf16.mxu0 0
    %1673 = vmatpush2.bf16.msra.mxu0 0
    %1674 = vmatprep.subr.bf16.mxu0 0
    %1675 = vmatpush2.bf16.msra.mxu0 0
    %1676 = vmatprep.subr.bf16.mxu0 0
    %1677 = vmatpush2.bf16.msra.mxu0 0
    %1678 = vmatprep.mubr.bf16.mxu0 0
    %1679 = vmatmul.mubr.bf16.gmra.mxu0 %v1644
    %v1680 = vpop.f32.mrf.mxu0
    %v1681 = vadd.f32 %v1630, %v1680
    %v1682 = vpop.f32.mrf.mxu0
    %v1683 = vpop.f32.mrf.mxu0
    %v1684 = vpop.f32.mrf.mxu0
    %1685 = vdwg.mxu0
    %v1686 = vmul.f32 %v1681, %v1681
    %v1687 = vmul.f32 %v1681, %v1686
    %v1688 = vmul.f32 %v1687, 0.044715
    %v1689 = vadd.f32 %v1681, %v1688
    %v1690 = vmul.f32 %v1689, 0.7978846
    %v1691 = vtanh.pop %v1690
    %v1692 = vadd.f32 %v1691, 1.0
    %v1693 = vmul.f32 %v1692, 0.5
    %v1694 = vmul.f32 %v1681, %v1693
    %v1695 = vpack.c.bf16 %v1694, %v1694
    %s1696 = scalar_lea.vmem %s7, 32
    %v1697 = vld [vmem:[%s1696] sm:$0xf]
    %v1698 = vld [vmem:[%s1696 + $0x4] sm:$0xf]
    %v1699 = vld [vmem:[%s1696 + $0x8] sm:$0xf]
    %v1700 = vld [vmem:[%s1696 + $0xc] sm:$0xf]
    %v1701 = vld [vmem:[%s1696 + $0x10] sm:$0xf]
    %v1702 = vld [vmem:[%s1696 + $0x14] sm:$0xf]
    %v1703 = vld [vmem:[%s1696 + $0x18] sm:$0xf]
    %v1704 = vld [vmem:[%s1696 + $0x1c] sm:$0xf]
    %v1705 = vlaneseq
    %v1706 = vshrl.u32 %v1705, 7
    %v1707 = vsub.s32 6, %v1706
    %v1708 = vrot.slane %v913, %v1707
    %v1717 = vunpack.c.l.b16 %v1697
    %v1718 = vunpack.c.l.b16 %v1698
    %v1719 = vunpack.c.l.b16 %v1699
    %v1720 = vunpack.c.l.b16 %v1700
    %v1721 = vunpack.c.l.b16 %v1701
    %v1722 = vunpack.c.l.b16 %v1702
    %v1723 = vunpack.c.l.b16 %v1703
    %v1724 = vunpack.c.l.b16 %v1704
    %v1725 = vpack.c.b16 %v1718, %v1717
    %v1726 = vpack.c.b16 %v1720, %v1719
    %v1727 = vpack.c.b16 %v1722, %v1721
    %v1728 = vpack.c.b16 %v1724, %v1723
    %v1734 = vsel %vm690, %v1695, 0
    %1736 = vmatprep.subr.bf16.mxu0 0
    %1737 = vmatpush1.bf16.msra.mxu0 0
    %1738 = vmatprep.subr.bf16.mxu0 0
    %1739 = vmatpush1.bf16.msra.mxu0 0
    %1740 = vmatprep.subr.bf16.mxu0 0
    %1741 = vmatpush1.bf16.msra.mxu0 0
    %1742 = vmatprep.subr.bf16.mxu0 0
    %1743 = vmatpush1.bf16.msra.mxu0 0
    %1744 = vmatprep.subr.bf16.mxu0 0
    %1745 = vmatpush1.bf16.msra.mxu0 %v1728
    %1746 = vmatprep.subr.bf16.mxu0 0
    %1747 = vmatpush1.bf16.msra.mxu0 %v1727
    %1748 = vmatprep.subr.bf16.mxu0 0
    %1749 = vmatpush1.bf16.msra.mxu0 %v1726
    %1750 = vmatprep.subr.bf16.mxu0 0
    %1751 = vmatpush1.bf16.msra.mxu0 %v1725
    %1752 = vmatprep.subr.bf16.mxu0 0
    %1753 = vmatpush2.bf16.msra.mxu0 0
    %1754 = vmatprep.subr.bf16.mxu0 0
    %1755 = vmatpush2.bf16.msra.mxu0 0
    %1756 = vmatprep.subr.bf16.mxu0 0
    %1757 = vmatpush2.bf16.msra.mxu0 0
    %1758 = vmatprep.subr.bf16.mxu0 0
    %1759 = vmatpush2.bf16.msra.mxu0 0
    %1760 = vmatprep.subr.bf16.mxu0 0
    %1761 = vmatpush2.bf16.msra.mxu0 0
    %1762 = vmatprep.subr.bf16.mxu0 0
    %1763 = vmatpush2.bf16.msra.mxu0 0
    %1764 = vmatprep.subr.bf16.mxu0 0
    %1765 = vmatpush2.bf16.msra.mxu0 0
    %1766 = vmatprep.subr.bf16.mxu0 0
    %1767 = vmatpush2.bf16.msra.mxu0 0
    %1768 = vmatprep.mubr.bf16.mxu0 0
    %1769 = vmatmul.mubr.bf16.gmra.mxu0 %v1734
    %v1770 = vpop.f32.mrf.mxu0
    %v1771 = vadd.f32 %v1708, %v1770
    %v1772 = vpop.f32.mrf.mxu0
    %v1773 = vpop.f32.mrf.mxu0
    %v1774 = vpop.f32.mrf.mxu0
    %1775 = vdwg.mxu0
    %v1776 = vadd.f32 %v1771, %v1597
    %1777 = vst.msk [vmem:[#allocation2] sm:$0xff] %vm34, %v1776
    // Predicated region
    $region34: #{tpu_custom_call.1} parent=1 // pred_check
      _
    $region35: #{tpu_custom_call.1} parent=1 // pred_check_branch
      %1779 = sbr.rel (0) target = $region37
    $region36: #{tpu_custom_call.1} parent=1 // pred_region
      %s1781 = ssub.s32 128, 128
      %1782 = vsyncadd [#allocation3], %s1781
      %s1784 = sshll.u32 [#allocation2], 4
      %s1785 = int_to_ptr.vmem [resolvable:$true] %s1784
      %1787 = dma.vmem_to_hbm [thread:$0]  %s1785, 128, %s8, [#allocation3]
    $region37: #{tpu_custom_call.1} parent=1 // pred_fallthru
      _
    // Predicated region
    $region38: #{tpu_custom_call.1} parent=1 // pred_check
      _
    $region39: #{tpu_custom_call.1} parent=1 // pred_check_branch
      %1789 = sbr.rel (0) target = $region41
    $region40: #{tpu_custom_call.1} parent=1 // pred_region
      %1790 = dma.done [#allocation3], 128
    $region41: #{tpu_custom_call.1} parent=1 // pred_fallthru
      _
    %1791 = vsyncpa [#allocation3], 1

</llo_original>
